<compile_context>
chip_gen: v7x
topology: tpu7x:2x2x1
jax: 0.10.0
libtpu: 0.0.40
codegen_flags: <defaults>
</compile_context>

<pallas_src>
import functools

import jax
import jax.numpy as jnp
from jax import lax
from jax.experimental import pallas as pl
from jax.experimental.pallas import tpu as pltpu


def _round_up(a, m):
    return (a + m - 1) // m * m


def _cdiv(a, b):
    return (a + b - 1) // b


def _decoder_kernel(x_ref, wp_ref, bp_ref, w1_ref, b1_ref, w2_ref, b2_ref,
                    o_ref, m_sc, l_sc, acc_sc, *,
                    n_total, tn, mask_n, approx_recip):
    # x_ref : (BB, TN, D) activations block (compute dtype, streamed)
    # wp_ref: (1, D)      proj weight row (compute dtype, grid-invariant)
    # bp_ref: (1, 1) SMEM proj bias scalar (f32)
    # w1_ref: (D, D), b1_ref: (1, D)   first decoder Linear (bias f32)
    # w2_ref: (D, Cp), b2_ref: (1, Cp) second decoder Linear, Cp = num_class -> 128
    # o_ref : (BB, Cp)    written only on the last token step
    # m_sc/l_sc/acc_sc : online-softmax running max / denom / pooled accumulator.
    ni = pl.program_id(1)
    n_steps = pl.num_programs(1)
    mm_dtype = w1_ref.dtype

    @pl.when(ni == 0)
    def _():
        m_sc[...] = jnp.full(m_sc.shape, -jnp.inf, jnp.float32)
        l_sc[...] = jnp.zeros(l_sc.shape, jnp.float32)
        acc_sc[...] = jnp.zeros(acc_sc.shape, jnp.float32)

    x = x_ref[...]                                        # (BB, TN, D) compute dtype
    wp = wp_ref[...]                                      # (1, D) -> broadcasts over (BB, TN)

    # Attention logits, lane-dense (BB, TN): VPU multiply, f32 reduce over D (lanes).
    logits = jnp.sum((x * wp).astype(jnp.float32), axis=-1) + bp_ref[0, 0]

    if mask_n:
        # Zero-padded token positions must not contribute to the softmax.
        col = lax.broadcasted_iota(jnp.int32, logits.shape, 1)
        logits = jnp.where(ni * tn + col < n_total, logits, -jnp.inf)

    # Online softmax over the token axis (dim=-2 of the original [B, N, 1]).
    m_prev = m_sc[...]                                                   # (BB, 1)
    m_new = jnp.maximum(m_prev, jnp.max(logits, axis=-1, keepdims=True))
    alpha = jnp.exp(m_prev - m_new)
    e = jnp.exp(logits - m_new)                                          # (BB, TN)
    l_sc[...] = alpha * l_sc[...] + jnp.sum(e, axis=-1, keepdims=True)

    # Pooled partial sum: VPU multiply + token-axis reduce (no M=1 MXU matmul).
    contrib = jnp.sum((e.astype(x.dtype)[:, :, None] * x).astype(jnp.float32), axis=1)
    acc_sc[...] = alpha * acc_sc[...] + contrib                          # (BB, D) f32
    m_sc[...] = m_new

    @pl.when(ni == n_steps - 1)
    def _():
        denom = l_sc[...]
        if approx_recip:
            inv = pl.reciprocal(denom, approx=True)                      # EUP, ~free
        else:
            inv = 1.0 / denom
        pooled = acc_sc[...] * inv                                       # (BB, D) f32
        h = jnp.dot(pooled.astype(mm_dtype), w1_ref[...],
                    preferred_element_type=jnp.float32) + b1_ref[...]
        h = jnp.maximum(h, 0.0)
        out = jnp.dot(h.astype(mm_dtype), w2_ref[...],
                      preferred_element_type=jnp.float32) + b2_ref[...]
        o_ref[...] = out.astype(o_ref.dtype)


def _vmem_capacity_bytes():
    try:
        return int(pltpu.get_tpu_info().vmem_capacity_bytes)
    except Exception:
        return 64 * 2 ** 20  # conservative fallback (v7x per-TensorCore)


def _choose_tiles(B, N, D, Cp, cds, budget, block_b):
    """VMEM-aware (BB, TN) selection instead of a fixed batch block."""
    # Grid-invariant weight residency; budget 2x in case single-buffering is refused.
    wfix = 2 * ((D * D + D * Cp + D) * cds + (D + Cp) * 4)
    # Per batch-row resident bytes: pooled acc + h/out f32 + double-buffered output.
    per_b = 8 * D + 12 * Cp + 16
    # Per (row, token) bytes: double-buffered x window (compute dtype) + ~1.25x f32
    # elementwise/reduce intermediates + (BB, TN) f32 softmax tiles.
    per_bt = D * (2 * cds + 5) + 16

    avail = max(budget - wfix, 1 << 20)
    tn_min = min(N, 8)

    bb = min(_round_up(max(block_b, 8), 8), _round_up(B, 8))
    while bb > 8 and bb * (per_b + tn_min * per_bt) > avail:
        bb -= 8
    bb = max(bb, 8)
    # Re-balance batch blocks so a ragged tail does not waste most of a block.
    bb = min(bb, _round_up(_cdiv(B, _cdiv(B, bb)), 8))

    if N <= 8:
        tn = N
    else:
        tn_max = (avail - bb * per_b) // (bb * per_bt)
        tn = max(8, min(N, (int(tn_max) // 8) * 8))
        if tn < N:
            # Re-balance token blocks.
            tn = min(N, _round_up(_cdiv(N, _cdiv(N, tn)), 8))
    return bb, tn


def decoder_forward(x, params, *, block_b=256, compute_dtype=jnp.bfloat16,
                    approx_reciprocal=True, single_buffer_weights=True):
    """x: [B, N, D] -> [B, num_class] float32.

    compute_dtype:  dtype x and the weights are streamed / fed to the MXU in
                    (default bfloat16; accumulation stays float32).  Note that x
                    itself is cast, not just the weights.  Ideally the caller
                    already supplies x in this dtype so the cast fuses upstream.
    approx_reciprocal: EUP approximate reciprocal for the softmax denominator.
    single_buffer_weights: request pl.Buffered(1) for grid-invariant weights
                    (falls back to default buffering if unsupported).
    """
    B, N, D = x.shape
    wp, bp, w1, b1, w2, b2 = (params["wp"], params["bp"], params["w1"],
                              params["b1"], params["w2"], params["b2"])
    C = w2.shape[1]
    cdt = jnp.dtype(compute_dtype)
    cds = cdt.itemsize

    # Lane-dense / MXU-friendly parameter layouts.
    wp_row = wp.reshape(1, D).astype(cdt)
    bp_s = bp.reshape(1, 1).astype(jnp.float32)
    w1_c = w1.astype(cdt)
    b1_r = b1.reshape(1, D).astype(jnp.float32)
    Cp = _round_up(max(C, 1), 128)
    w2_c = jnp.zeros((D, Cp), cdt).at[:, :C].set(w2.astype(cdt))
    b2_r = jnp.zeros((1, Cp), jnp.float32).at[:, :C].set(
        b2.reshape(1, C).astype(jnp.float32))

    # Generation-specific VMEM budget (v5e/v6e: 128 MiB, v7x: 64 MiB per TC).
    cap = _vmem_capacity_bytes()
    sizing_budget = int(0.70 * cap)                 # tiles sized against this
    vmem_limit = max(32 * 2 ** 20, int(0.92 * cap))  # scoped limit, with headroom

    BB, TN = _choose_tiles(B, N, D, Cp, cds, sizing_budget, block_b)
    Bp, Np = _round_up(B, BB), _round_up(N, TN)
    mask_n = Np != N

    # Stream x in the compute dtype (halves x DMA for bf16); pad batch/token dims.
    xc = x.astype(cdt)
    if (Bp, Np) != (B, N):
        xc = jnp.pad(xc, ((0, Bp - B), (0, Np - N), (0, 0)))

    grid = (Bp // BB, Np // TN)
    kernel = functools.partial(_decoder_kernel, n_total=N, tn=TN,
                               mask_n=mask_n, approx_recip=approx_reciprocal)

    def build(weight_mode):
        def wspec(shape):
            if weight_mode is None:
                return pl.BlockSpec(shape, lambda b, n: (0, 0))
            return pl.BlockSpec(shape, lambda b, n: (0, 0),
                                pipeline_mode=weight_mode)

        return pl.pallas_call(
            kernel,
            out_shape=jax.ShapeDtypeStruct((Bp, Cp), jnp.float32),
            grid_spec=pltpu.PrefetchScalarGridSpec(
                num_scalar_prefetch=0,
                grid=grid,
                in_specs=[
                    pl.BlockSpec((BB, TN, D), lambda b, n: (b, n, 0)),    # x block
                    wspec((1, D)),                                        # wp
                    pl.BlockSpec(memory_space=pltpu.MemorySpace.SMEM),    # bp scalar
                    wspec((D, D)),                                        # w1
                    wspec((1, D)),                                        # b1
                    wspec((D, Cp)),                                       # w2 (lane-padded)
                    wspec((1, Cp)),                                       # b2 (lane-padded)
                ],
                out_specs=pl.BlockSpec((BB, Cp), lambda b, n: (b, 0)),
                scratch_shapes=[
                    pltpu.VMEM((BB, 1), jnp.float32),   # running max
                    pltpu.VMEM((BB, 1), jnp.float32),   # running denominator
                    pltpu.VMEM((BB, D), jnp.float32),   # pooled f32 accumulator
                ],
            ),
            compiler_params=pltpu.CompilerParams(
                dimension_semantics=("parallel", "arbitrary"),
                vmem_limit_bytes=vmem_limit,
            ),
        )

    args = (xc, wp_row, bp_s, w1_c, b1_r, w2_c, b2_r)
    if single_buffer_weights:
        try:
            # Grid-invariant weights need no double buffering; halving their
            # residency frees VMEM for larger (BB, TN) blocks.
            out = build(pl.Buffered(1))(*args)
        except Exception:
            out = build(None)(*args)
    else:
        out = build(None)(*args)

    return out[:B, :C]


def init_params(key, dim, num_class):
    """Deterministic synthetic parameters (Linear weights stored as [in, out])."""
    k1, k2, k3, k4, k5, k6 = jax.random.split(key, 6)
    scale = 0.1
    return {
        "wp": scale * jax.random.normal(k1, (dim, 1), jnp.float32),
        "bp": scale * jax.random.normal(k2, (1, 1), jnp.float32),
        "w1": scale * jax.random.normal(k3, (dim, dim), jnp.float32),
        "b1": scale * jax.random.normal(k4, (1, dim), jnp.float32),
        "w2": scale * jax.random.normal(k5, (dim, num_class), jnp.float32),
        "b2": scale * jax.random.normal(k6, (1, num_class), jnp.float32),
    }


def decoder_reference(x, p):
    """Pure-JAX reference mirroring the PyTorch forward."""
    logits = jnp.einsum("bnd,do->bno", x, p["wp"]) + p["bp"][0, 0]        # (B, N, 1)
    attn = jax.nn.softmax(logits, axis=-2)
    pooled = jnp.einsum("bno,bnd->bd", attn, x)                           # (B, D)
    h = jax.nn.relu(pooled @ p["w1"] + p["b1"])
    return h @ p["w2"] + p["b2"]


if __name__ == "__main__":
    B, N, D, C = 2, 8, 32, 4
    key = jax.random.PRNGKey(0)
    kx, kp = jax.random.split(key)
    x = jax.random.normal(kx, (B, N, D), jnp.float32)
    params = init_params(kp, D, C)

    ref = decoder_reference(x, params)

    # Full-precision path (tolerance covers the EUP approximate reciprocal).
    out_f32 = jax.block_until_ready(
        decoder_forward(x, params, compute_dtype=jnp.float32))
    assert out_f32.shape == (B, C)
    assert jnp.allclose(out_f32, ref, atol=1e-2, rtol=1e-2), (out_f32, ref)

    # Default bf16-streaming path: halves x / weight HBM traffic, f32 accumulation.
    out_bf16 = jax.block_until_ready(decoder_forward(x, params))
    assert out_bf16.shape == (B, C)
    assert jnp.allclose(out_bf16, ref, atol=6e-2, rtol=6e-2), (out_bf16, ref)

    print("KERNEL_OK")
</pallas_src>

<mosaic_0001>
module attributes {stable_mosaic.version = 11 : i64} {
  func.func @_decoder_kernel(%arg0: i32, %arg1: i32, %arg2: memref<8x8x32xf32, #tpu.memory_space<vmem>>, %arg3: memref<1x32xf32, #tpu.memory_space<vmem>>, %arg4: memref<1x1xf32, #tpu.memory_space<smem>>, %arg5: memref<32x32xf32, #tpu.memory_space<vmem>>, %arg6: memref<1x32xf32, #tpu.memory_space<vmem>>, %arg7: memref<32x128xf32, #tpu.memory_space<vmem>>, %arg8: memref<1x128xf32, #tpu.memory_space<vmem>>, %arg9: memref<8x128xf32, #tpu.memory_space<vmem>>, %arg10: memref<8x1xf32, #tpu.memory_space<vmem>>, %arg11: memref<8x1xf32, #tpu.memory_space<vmem>>, %arg12: memref<8x32xf32, #tpu.memory_space<vmem>>) attributes {dimension_semantics = [#tpu.dimension_semantics<parallel>, #tpu.dimension_semantics<arbitrary>], iteration_bounds = array<i64: 1, 1>, scalar_prefetch = 0 : i64, scratch_operands = 3 : i64, tpu.core_type = #tpu.core_type<tc>, window_params = [{transform_indices = @transform_0, window_bounds = array<i64: 8, 8, 32>}, {pipeline_mode = #tpu.pipeline_mode<synchronous>, transform_indices = @transform_1, window_bounds = array<i64: 1, 32>}, {transform_indices = @transform_2, window_bounds = array<i64: 1, 1>}, {pipeline_mode = #tpu.pipeline_mode<synchronous>, transform_indices = @transform_3, window_bounds = array<i64: 32, 32>}, {pipeline_mode = #tpu.pipeline_mode<synchronous>, transform_indices = @transform_4, window_bounds = array<i64: 1, 32>}, {pipeline_mode = #tpu.pipeline_mode<synchronous>, transform_indices = @transform_5, window_bounds = array<i64: 32, 128>}, {pipeline_mode = #tpu.pipeline_mode<synchronous>, transform_indices = @transform_6, window_bounds = array<i64: 1, 128>}, {transform_indices = @transform_7, window_bounds = array<i64: 8, 128>}]} {
    %c0_i32 = arith.constant 0 : i32
    %0 = arith.cmpi eq, %arg1, %c0_i32 : i32
    %1 = arith.extui %0 : i1 to i32
    %c0_i32_0 = arith.constant 0 : i32
    %2 = arith.cmpi ne, %1, %c0_i32_0 : i32
    scf.if %2 {
      %cst_24 = arith.constant 0xFF800000 : f32
      %40 = vector.broadcast %cst_24 : f32 to vector<8x1xf32>
      %c0_25 = arith.constant 0 : index
      %c0_26 = arith.constant 0 : index
      %41 = vector.load %arg10[%c0_25, %c0_26] : memref<8x1xf32, #tpu.memory_space<vmem>>, vector<8x1xf32>
      tpu.vector_store %arg10[%c0_25, %c0_26], %40 {strides = array<i32>} : memref<8x1xf32, #tpu.memory_space<vmem>>, vector<8x1xf32>,
      %cst_27 = arith.constant 0.000000e+00 : f32
      %42 = vector.broadcast %cst_27 : f32 to vector<8x1xf32>
      %c0_28 = arith.constant 0 : index
      %c0_29 = arith.constant 0 : index
      %43 = vector.load %arg11[%c0_28, %c0_29] : memref<8x1xf32, #tpu.memory_space<vmem>>, vector<8x1xf32>
      tpu.vector_store %arg11[%c0_28, %c0_29], %42 {strides = array<i32>} : memref<8x1xf32, #tpu.memory_space<vmem>>, vector<8x1xf32>,
      %cst_30 = arith.constant 0.000000e+00 : f32
      %44 = vector.broadcast %cst_30 : f32 to vector<8x32xf32>
      %c0_31 = arith.constant 0 : index
      %c0_32 = arith.constant 0 : index
      %45 = vector.load %arg12[%c0_31, %c0_32] : memref<8x32xf32, #tpu.memory_space<vmem>>, vector<8x32xf32>
      tpu.vector_store %arg12[%c0_31, %c0_32], %44 {strides = array<i32>} : memref<8x32xf32, #tpu.memory_space<vmem>>, vector<8x32xf32>,
    } else {
    }
    %c0 = arith.constant 0 : index
    %c0_1 = arith.constant 0 : index
    %c0_2 = arith.constant 0 : index
    %3 = vector.load %arg2[%c0, %c0_1, %c0_2] : memref<8x8x32xf32, #tpu.memory_space<vmem>>, vector<8x8x32xf32>
    %c0_3 = arith.constant 0 : index
    %c0_4 = arith.constant 0 : index
    %4 = vector.load %arg3[%c0_3, %c0_4] : memref<1x32xf32, #tpu.memory_space<vmem>>, vector<1x32xf32>
    %5 = vector.shape_cast %4 : vector<1x32xf32> to vector<1x1x32xf32>
    %6 = vector.broadcast %5 : vector<1x1x32xf32> to vector<8x8x32xf32>
    %7 = arith.mulf %3, %6 : vector<8x8x32xf32>
    %cst = arith.constant dense<0.000000e+00> : vector<8x8xf32>
    %8 = vector.multi_reduction <add>, %7, %cst [2] : vector<8x8x32xf32> to vector<8x8xf32>
    %c0_5 = arith.constant 0 : index
    %c0_6 = arith.constant 0 : index
    %9 = memref.load %arg4[%c0_5, %c0_6] : memref<1x1xf32, #tpu.memory_space<smem>>
    %10 = vector.broadcast %9 : f32 to vector<8x8xf32>
    %11 = arith.addf %8, %10 : vector<8x8xf32>
    %c0_7 = arith.constant 0 : index
    %c0_8 = arith.constant 0 : index
    %12 = vector.load %arg10[%c0_7, %c0_8] : memref<8x1xf32, #tpu.memory_space<vmem>>, vector<8x1xf32>
    %cst_9 = arith.constant dense<0xFF800000> : vector<8xf32>
    %13 = vector.multi_reduction <maximumf>, %11, %cst_9 [1] : vector<8x8xf32> to vector<8xf32>
    %14 = vector.shape_cast %13 : vector<8xf32> to vector<8x1xf32>
    %15 = arith.maximumf %12, %14 : vector<8x1xf32>
    %16 = arith.subf %12, %15 : vector<8x1xf32>
    %17 = math.exp %16 : vector<8x1xf32>
    %18 = vector.broadcast %15 : vector<8x1xf32> to vector<8x8xf32>
    %19 = arith.subf %11, %18 : vector<8x8xf32>
    %20 = math.exp %19 : vector<8x8xf32>
    %c0_10 = arith.constant 0 : index
    %c0_11 = arith.constant 0 : index
    %21 = vector.load %arg11[%c0_10, %c0_11] : memref<8x1xf32, #tpu.memory_space<vmem>>, vector<8x1xf32>
    %22 = arith.mulf %17, %21 : vector<8x1xf32>
    %cst_12 = arith.constant dense<0.000000e+00> : vector<8xf32>
    %23 = vector.multi_reduction <add>, %20, %cst_12 [1] : vector<8x8xf32> to vector<8xf32>
    %24 = vector.shape_cast %23 : vector<8xf32> to vector<8x1xf32>
    %25 = arith.addf %22, %24 : vector<8x1xf32>
    %c0_13 = arith.constant 0 : index
    %c0_14 = arith.constant 0 : index
    %26 = vector.load %arg11[%c0_13, %c0_14] : memref<8x1xf32, #tpu.memory_space<vmem>>, vector<8x1xf32>
    tpu.vector_store %arg11[%c0_13, %c0_14], %25 {strides = array<i32>} : memref<8x1xf32, #tpu.memory_space<vmem>>, vector<8x1xf32>,
    %27 = vector.shape_cast %20 : vector<8x8xf32> to vector<8x8x1xf32>
    %28 = vector.broadcast %27 : vector<8x8x1xf32> to vector<8x8x32xf32>
    %29 = arith.mulf %28, %3 : vector<8x8x32xf32>
    %cst_15 = arith.constant dense<0.000000e+00> : vector<8x32xf32>
    %30 = vector.multi_reduction <add>, %29, %cst_15 [1] : vector<8x8x32xf32> to vector<8x32xf32>
    %c0_16 = arith.constant 0 : index
    %c0_17 = arith.constant 0 : index
    %31 = vector.load %arg12[%c0_16, %c0_17] : memref<8x32xf32, #tpu.memory_space<vmem>>, vector<8x32xf32>
    %32 = vector.broadcast %17 : vector<8x1xf32> to vector<8x32xf32>
    %33 = arith.mulf %32, %31 : vector<8x32xf32>
    %34 = arith.addf %33, %30 : vector<8x32xf32>
    %c0_18 = arith.constant 0 : index
    %c0_19 = arith.constant 0 : index
    %35 = vector.load %arg12[%c0_18, %c0_19] : memref<8x32xf32, #tpu.memory_space<vmem>>, vector<8x32xf32>
    tpu.vector_store %arg12[%c0_18, %c0_19], %34 {strides = array<i32>} : memref<8x32xf32, #tpu.memory_space<vmem>>, vector<8x32xf32>,
    %c0_20 = arith.constant 0 : index
    %c0_21 = arith.constant 0 : index
    %36 = vector.load %arg10[%c0_20, %c0_21] : memref<8x1xf32, #tpu.memory_space<vmem>>, vector<8x1xf32>
    tpu.vector_store %arg10[%c0_20, %c0_21], %15 {strides = array<i32>} : memref<8x1xf32, #tpu.memory_space<vmem>>, vector<8x1xf32>,
    %c0_i32_22 = arith.constant 0 : i32
    %37 = arith.cmpi eq, %arg1, %c0_i32_22 : i32
    %38 = arith.extui %37 : i1 to i32
    %c0_i32_23 = arith.constant 0 : i32
    %39 = arith.cmpi ne, %38, %c0_i32_23 : i32
    scf.if %39 {
      %c0_24 = arith.constant 0 : index
      %c0_25 = arith.constant 0 : index
      %40 = vector.load %arg11[%c0_24, %c0_25] : memref<8x1xf32, #tpu.memory_space<vmem>>, vector<8x1xf32>
      %41 = tpu.reciprocal %40 {approx = true} : vector<8x1xf32> -> vector<8x1xf32>
      %c0_26 = arith.constant 0 : index
      %c0_27 = arith.constant 0 : index
      %42 = vector.load %arg12[%c0_26, %c0_27] : memref<8x32xf32, #tpu.memory_space<vmem>>, vector<8x32xf32>
      %43 = vector.broadcast %41 : vector<8x1xf32> to vector<8x32xf32>
      %44 = arith.mulf %42, %43 : vector<8x32xf32>
      %c0_28 = arith.constant 0 : index
      %c0_29 = arith.constant 0 : index
      %45 = vector.load %arg5[%c0_28, %c0_29] : memref<32x32xf32, #tpu.memory_space<vmem>>, vector<32x32xf32>
      %cst_30 = arith.constant dense<0.000000e+00> : vector<8x32xf32>
      %46 = tpu.matmul %44, %45, %cst_30 {dimension_numbers = #tpu.dot_dimension_numbers<[1], [0], [0], [1], [0, 0, 1, 1], [], []>} : vector<8x32xf32>, vector<32x32xf32>, vector<8x32xf32> -> vector<8x32xf32>
      %c0_31 = arith.constant 0 : index
      %c0_32 = arith.constant 0 : index
      %47 = vector.load %arg6[%c0_31, %c0_32] : memref<1x32xf32, #tpu.memory_space<vmem>>, vector<1x32xf32>
      %48 = vector.broadcast %47 : vector<1x32xf32> to vector<8x32xf32>
      %49 = arith.addf %46, %48 : vector<8x32xf32>
      %cst_33 = arith.constant 0.000000e+00 : f32
      %50 = vector.broadcast %cst_33 : f32 to vector<8x32xf32>
      %51 = arith.maximumf %49, %50 : vector<8x32xf32>
      %c0_34 = arith.constant 0 : index
      %c0_35 = arith.constant 0 : index
      %52 = vector.load %arg7[%c0_34, %c0_35] : memref<32x128xf32, #tpu.memory_space<vmem>>, vector<32x128xf32>
      %cst_36 = arith.constant dense<0.000000e+00> : vector<8x128xf32>
      %53 = tpu.matmul %51, %52, %cst_36 {dimension_numbers = #tpu.dot_dimension_numbers<[1], [0], [0], [1], [0, 0, 1, 1], [], []>} : vector<8x32xf32>, vector<32x128xf32>, vector<8x128xf32> -> vector<8x128xf32>
      %c0_37 = arith.constant 0 : index
      %c0_38 = arith.constant 0 : index
      %54 = vector.load %arg8[%c0_37, %c0_38] : memref<1x128xf32, #tpu.memory_space<vmem>>, vector<1x128xf32>
      %55 = vector.broadcast %54 : vector<1x128xf32> to vector<8x128xf32>
      %56 = arith.addf %53, %55 : vector<8x128xf32>
      %c0_39 = arith.constant 0 : index
      %c0_40 = arith.constant 0 : index
      %57 = vector.load %arg9[%c0_39, %c0_40] : memref<8x128xf32, #tpu.memory_space<vmem>>, vector<8x128xf32>
      tpu.vector_store %arg9[%c0_39, %c0_40], %56 {strides = array<i32>} : memref<8x128xf32, #tpu.memory_space<vmem>>, vector<8x128xf32>,
    } else {
    }
    return
  }
  func.func @transform_0(%arg0: i32, %arg1: i32) -> (i32, i32, i32) {
    %c0_i32 = arith.constant 0 : i32
    %c0_i32_0 = arith.constant 0 : i32
    return %arg0, %arg1, %c0_i32 : i32, i32, i32
  }
  func.func @transform_1(%arg0: i32, %arg1: i32) -> (i32, i32) {
    %c0_i32 = arith.constant 0 : i32
    %c0_i32_0 = arith.constant 0 : i32
    %c0_i32_1 = arith.constant 0 : i32
    return %c0_i32, %c0_i32_0 : i32, i32
  }
  func.func @transform_2(%arg0: i32, %arg1: i32) -> (i32, i32) {
    %c0_i32 = arith.constant 0 : i32
    %c0_i32_0 = arith.constant 0 : i32
    %c0_i32_1 = arith.constant 0 : i32
    return %c0_i32, %c0_i32_0 : i32, i32
  }
  func.func @transform_3(%arg0: i32, %arg1: i32) -> (i32, i32) {
    %c0_i32 = arith.constant 0 : i32
    %c0_i32_0 = arith.constant 0 : i32
    %c0_i32_1 = arith.constant 0 : i32
    return %c0_i32, %c0_i32_0 : i32, i32
  }
  func.func @transform_4(%arg0: i32, %arg1: i32) -> (i32, i32) {
    %c0_i32 = arith.constant 0 : i32
    %c0_i32_0 = arith.constant 0 : i32
    %c0_i32_1 = arith.constant 0 : i32
    return %c0_i32, %c0_i32_0 : i32, i32
  }
  func.func @transform_5(%arg0: i32, %arg1: i32) -> (i32, i32) {
    %c0_i32 = arith.constant 0 : i32
    %c0_i32_0 = arith.constant 0 : i32
    %c0_i32_1 = arith.constant 0 : i32
    return %c0_i32, %c0_i32_0 : i32, i32
  }
  func.func @transform_6(%arg0: i32, %arg1: i32) -> (i32, i32) {
    %c0_i32 = arith.constant 0 : i32
    %c0_i32_0 = arith.constant 0 : i32
    %c0_i32_1 = arith.constant 0 : i32
    return %c0_i32, %c0_i32_0 : i32, i32
  }
  func.func @transform_7(%arg0: i32, %arg1: i32) -> (i32, i32) {
    %c0_i32 = arith.constant 0 : i32
    %c0_i32_0 = arith.constant 0 : i32
    return %arg0, %c0_i32 : i32, i32
  }
}

module attributes {stable_mosaic.version = 11 : i64} {
  func.func @_decoder_kernel(%arg0: i32, %arg1: i32, %arg2: memref<8x8x32xf32, #tpu.memory_space<vmem>>, %arg3: memref<1x32xf32, #tpu.memory_space<vmem>>, %arg4: memref<1x1xf32, #tpu.memory_space<smem>>, %arg5: memref<32x32xf32, #tpu.memory_space<vmem>>, %arg6: memref<1x32xf32, #tpu.memory_space<vmem>>, %arg7: memref<32x128xf32, #tpu.memory_space<vmem>>, %arg8: memref<1x128xf32, #tpu.memory_space<vmem>>, %arg9: memref<8x128xf32, #tpu.memory_space<vmem>>, %arg10: memref<8x1xf32, #tpu.memory_space<vmem>>, %arg11: memref<8x1xf32, #tpu.memory_space<vmem>>, %arg12: memref<8x32xf32, #tpu.memory_space<vmem>>) attributes {dimension_semantics = [#tpu.dimension_semantics<parallel>, #tpu.dimension_semantics<arbitrary>], iteration_bounds = array<i64: 1, 1>, scalar_prefetch = 0 : i64, scratch_operands = 3 : i64, tpu.core_type = #tpu.core_type<tc>, window_params = [{transform_indices = @transform_0, window_bounds = array<i64: 8, 8, 32>}, {pipeline_mode = #tpu.pipeline_mode<synchronous>, transform_indices = @transform_1, window_bounds = array<i64: 1, 32>}, {transform_indices = @transform_2, window_bounds = array<i64: 1, 1>}, {pipeline_mode = #tpu.pipeline_mode<synchronous>, transform_indices = @transform_3, window_bounds = array<i64: 32, 32>}, {pipeline_mode = #tpu.pipeline_mode<synchronous>, transform_indices = @transform_4, window_bounds = array<i64: 1, 32>}, {pipeline_mode = #tpu.pipeline_mode<synchronous>, transform_indices = @transform_5, window_bounds = array<i64: 32, 128>}, {pipeline_mode = #tpu.pipeline_mode<synchronous>, transform_indices = @transform_6, window_bounds = array<i64: 1, 128>}, {transform_indices = @transform_7, window_bounds = array<i64: 8, 128>}]} {
    %c0_i32 = arith.constant 0 : i32
    %0 = arith.cmpi eq, %arg1, %c0_i32 : i32
    %1 = arith.extui %0 : i1 to i32
    %c0_i32_0 = arith.constant 0 : i32
    %2 = arith.cmpi ne, %1, %c0_i32_0 : i32
    scf.if %2 {
      %cst_24 = arith.constant 0xFF800000 : f32
      %40 = vector.broadcast %cst_24 : f32 to vector<8x1xf32>
      %c0_25 = arith.constant 0 : index
      %c0_26 = arith.constant 0 : index
      %41 = vector.load %arg10[%c0_25, %c0_26] : memref<8x1xf32, #tpu.memory_space<vmem>>, vector<8x1xf32>
      tpu.vector_store %arg10[%c0_25, %c0_26], %40 {strides = array<i32>} : memref<8x1xf32, #tpu.memory_space<vmem>>, vector<8x1xf32>,
      %cst_27 = arith.constant 0.000000e+00 : f32
      %42 = vector.broadcast %cst_27 : f32 to vector<8x1xf32>
      %c0_28 = arith.constant 0 : index
      %c0_29 = arith.constant 0 : index
      %43 = vector.load %arg11[%c0_28, %c0_29] : memref<8x1xf32, #tpu.memory_space<vmem>>, vector<8x1xf32>
      tpu.vector_store %arg11[%c0_28, %c0_29], %42 {strides = array<i32>} : memref<8x1xf32, #tpu.memory_space<vmem>>, vector<8x1xf32>,
      %cst_30 = arith.constant 0.000000e+00 : f32
      %44 = vector.broadcast %cst_30 : f32 to vector<8x32xf32>
      %c0_31 = arith.constant 0 : index
      %c0_32 = arith.constant 0 : index
      %45 = vector.load %arg12[%c0_31, %c0_32] : memref<8x32xf32, #tpu.memory_space<vmem>>, vector<8x32xf32>
      tpu.vector_store %arg12[%c0_31, %c0_32], %44 {strides = array<i32>} : memref<8x32xf32, #tpu.memory_space<vmem>>, vector<8x32xf32>,
    } else {
    }
    %c0 = arith.constant 0 : index
    %c0_1 = arith.constant 0 : index
    %c0_2 = arith.constant 0 : index
    %3 = vector.load %arg2[%c0, %c0_1, %c0_2] : memref<8x8x32xf32, #tpu.memory_space<vmem>>, vector<8x8x32xf32>
    %c0_3 = arith.constant 0 : index
    %c0_4 = arith.constant 0 : index
    %4 = vector.load %arg3[%c0_3, %c0_4] : memref<1x32xf32, #tpu.memory_space<vmem>>, vector<1x32xf32>
    %5 = vector.shape_cast %4 : vector<1x32xf32> to vector<1x1x32xf32>
    %6 = vector.broadcast %5 : vector<1x1x32xf32> to vector<8x8x32xf32>
    %7 = arith.mulf %3, %6 : vector<8x8x32xf32>
    %cst = arith.constant dense<0.000000e+00> : vector<8x8xf32>
    %8 = vector.multi_reduction <add>, %7, %cst [2] : vector<8x8x32xf32> to vector<8x8xf32>
    %c0_5 = arith.constant 0 : index
    %c0_6 = arith.constant 0 : index
    %9 = memref.load %arg4[%c0_5, %c0_6] : memref<1x1xf32, #tpu.memory_space<smem>>
    %10 = vector.broadcast %9 : f32 to vector<8x8xf32>
    %11 = arith.addf %8, %10 : vector<8x8xf32>
    %c0_7 = arith.constant 0 : index
    %c0_8 = arith.constant 0 : index
    %12 = vector.load %arg10[%c0_7, %c0_8] : memref<8x1xf32, #tpu.memory_space<vmem>>, vector<8x1xf32>
    %cst_9 = arith.constant dense<0xFF800000> : vector<8xf32>
    %13 = vector.multi_reduction <maximumf>, %11, %cst_9 [1] : vector<8x8xf32> to vector<8xf32>
    %14 = vector.shape_cast %13 : vector<8xf32> to vector<8x1xf32>
    %15 = arith.maximumf %12, %14 : vector<8x1xf32>
    %16 = arith.subf %12, %15 : vector<8x1xf32>
    %17 = math.exp %16 : vector<8x1xf32>
    %18 = vector.broadcast %15 : vector<8x1xf32> to vector<8x8xf32>
    %19 = arith.subf %11, %18 : vector<8x8xf32>
    %20 = math.exp %19 : vector<8x8xf32>
    %c0_10 = arith.constant 0 : index
    %c0_11 = arith.constant 0 : index
    %21 = vector.load %arg11[%c0_10, %c0_11] : memref<8x1xf32, #tpu.memory_space<vmem>>, vector<8x1xf32>
    %22 = arith.mulf %17, %21 : vector<8x1xf32>
    %cst_12 = arith.constant dense<0.000000e+00> : vector<8xf32>
    %23 = vector.multi_reduction <add>, %20, %cst_12 [1] : vector<8x8xf32> to vector<8xf32>
    %24 = vector.shape_cast %23 : vector<8xf32> to vector<8x1xf32>
    %25 = arith.addf %22, %24 : vector<8x1xf32>
    %c0_13 = arith.constant 0 : index
    %c0_14 = arith.constant 0 : index
    %26 = vector.load %arg11[%c0_13, %c0_14] : memref<8x1xf32, #tpu.memory_space<vmem>>, vector<8x1xf32>
    tpu.vector_store %arg11[%c0_13, %c0_14], %25 {strides = array<i32>} : memref<8x1xf32, #tpu.memory_space<vmem>>, vector<8x1xf32>,
    %27 = vector.shape_cast %20 : vector<8x8xf32> to vector<8x8x1xf32>
    %28 = vector.broadcast %27 : vector<8x8x1xf32> to vector<8x8x32xf32>
    %29 = arith.mulf %28, %3 : vector<8x8x32xf32>
    %cst_15 = arith.constant dense<0.000000e+00> : vector<8x32xf32>
    %30 = vector.multi_reduction <add>, %29, %cst_15 [1] : vector<8x8x32xf32> to vector<8x32xf32>
    %c0_16 = arith.constant 0 : index
    %c0_17 = arith.constant 0 : index
    %31 = vector.load %arg12[%c0_16, %c0_17] : memref<8x32xf32, #tpu.memory_space<vmem>>, vector<8x32xf32>
    %32 = vector.broadcast %17 : vector<8x1xf32> to vector<8x32xf32>
    %33 = arith.mulf %32, %31 : vector<8x32xf32>
    %34 = arith.addf %33, %30 : vector<8x32xf32>
    %c0_18 = arith.constant 0 : index
    %c0_19 = arith.constant 0 : index
    %35 = vector.load %arg12[%c0_18, %c0_19] : memref<8x32xf32, #tpu.memory_space<vmem>>, vector<8x32xf32>
    tpu.vector_store %arg12[%c0_18, %c0_19], %34 {strides = array<i32>} : memref<8x32xf32, #tpu.memory_space<vmem>>, vector<8x32xf32>,
    %c0_20 = arith.constant 0 : index
    %c0_21 = arith.constant 0 : index
    %36 = vector.load %arg10[%c0_20, %c0_21] : memref<8x1xf32, #tpu.memory_space<vmem>>, vector<8x1xf32>
    tpu.vector_store %arg10[%c0_20, %c0_21], %15 {strides = array<i32>} : memref<8x1xf32, #tpu.memory_space<vmem>>, vector<8x1xf32>,
    %c0_i32_22 = arith.constant 0 : i32
    %37 = arith.cmpi eq, %arg1, %c0_i32_22 : i32
    %38 = arith.extui %37 : i1 to i32
    %c0_i32_23 = arith.constant 0 : i32
    %39 = arith.cmpi ne, %38, %c0_i32_23 : i32
    scf.if %39 {
      %c0_24 = arith.constant 0 : index
      %c0_25 = arith.constant 0 : index
      %40 = vector.load %arg11[%c0_24, %c0_25] : memref<8x1xf32, #tpu.memory_space<vmem>>, vector<8x1xf32>
      %41 = tpu.reciprocal %40 {approx = true} : vector<8x1xf32> -> vector<8x1xf32>
      %c0_26 = arith.constant 0 : index
      %c0_27 = arith.constant 0 : index
      %42 = vector.load %arg12[%c0_26, %c0_27] : memref<8x32xf32, #tpu.memory_space<vmem>>, vector<8x32xf32>
      %43 = vector.broadcast %41 : vector<8x1xf32> to vector<8x32xf32>
      %44 = arith.mulf %42, %43 : vector<8x32xf32>
      %c0_28 = arith.constant 0 : index
      %c0_29 = arith.constant 0 : index
      %45 = vector.load %arg5[%c0_28, %c0_29] : memref<32x32xf32, #tpu.memory_space<vmem>>, vector<32x32xf32>
      %cst_30 = arith.constant dense<0.000000e+00> : vector<8x32xf32>
      %46 = tpu.matmul %44, %45, %cst_30 {dimension_numbers = #tpu.dot_dimension_numbers<[1], [0], [0], [1], [0, 0, 1, 1], [], []>} : vector<8x32xf32>, vector<32x32xf32>, vector<8x32xf32> -> vector<8x32xf32>
      %c0_31 = arith.constant 0 : index
      %c0_32 = arith.constant 0 : index
      %47 = vector.load %arg6[%c0_31, %c0_32] : memref<1x32xf32, #tpu.memory_space<vmem>>, vector<1x32xf32>
      %48 = vector.broadcast %47 : vector<1x32xf32> to vector<8x32xf32>
      %49 = arith.addf %46, %48 : vector<8x32xf32>
      %cst_33 = arith.constant 0.000000e+00 : f32
      %50 = vector.broadcast %cst_33 : f32 to vector<8x32xf32>
      %51 = arith.maximumf %49, %50 : vector<8x32xf32>
      %c0_34 = arith.constant 0 : index
      %c0_35 = arith.constant 0 : index
      %52 = vector.load %arg7[%c0_34, %c0_35] : memref<32x128xf32, #tpu.memory_space<vmem>>, vector<32x128xf32>
      %cst_36 = arith.constant dense<0.000000e+00> : vector<8x128xf32>
      %53 = tpu.matmul %51, %52, %cst_36 {dimension_numbers = #tpu.dot_dimension_numbers<[1], [0], [0], [1], [0, 0, 1, 1], [], []>} : vector<8x32xf32>, vector<32x128xf32>, vector<8x128xf32> -> vector<8x128xf32>
      %c0_37 = arith.constant 0 : index
      %c0_38 = arith.constant 0 : index
      %54 = vector.load %arg8[%c0_37, %c0_38] : memref<1x128xf32, #tpu.memory_space<vmem>>, vector<1x128xf32>
      %55 = vector.broadcast %54 : vector<1x128xf32> to vector<8x128xf32>
      %56 = arith.addf %53, %55 : vector<8x128xf32>
      %c0_39 = arith.constant 0 : index
      %c0_40 = arith.constant 0 : index
      %57 = vector.load %arg9[%c0_39, %c0_40] : memref<8x128xf32, #tpu.memory_space<vmem>>, vector<8x128xf32>
      tpu.vector_store %arg9[%c0_39, %c0_40], %56 {strides = array<i32>} : memref<8x128xf32, #tpu.memory_space<vmem>>, vector<8x128xf32>,
    } else {
    }
    return
  }
  func.func @transform_0(%arg0: i32, %arg1: i32) -> (i32, i32, i32) {
    %c0_i32 = arith.constant 0 : i32
    %c0_i32_0 = arith.constant 0 : i32
    return %arg0, %arg1, %c0_i32 : i32, i32, i32
  }
  func.func @transform_1(%arg0: i32, %arg1: i32) -> (i32, i32) {
    %c0_i32 = arith.constant 0 : i32
    %c0_i32_0 = arith.constant 0 : i32
    %c0_i32_1 = arith.constant 0 : i32
    return %c0_i32, %c0_i32_0 : i32, i32
  }
  func.func @transform_2(%arg0: i32, %arg1: i32) -> (i32, i32) {
    %c0_i32 = arith.constant 0 : i32
    %c0_i32_0 = arith.constant 0 : i32
    %c0_i32_1 = arith.constant 0 : i32
    return %c0_i32, %c0_i32_0 : i32, i32
  }
  func.func @transform_3(%arg0: i32, %arg1: i32) -> (i32, i32) {
    %c0_i32 = arith.constant 0 : i32
    %c0_i32_0 = arith.constant 0 : i32
    %c0_i32_1 = arith.constant 0 : i32
    return %c0_i32, %c0_i32_0 : i32, i32
  }
  func.func @transform_4(%arg0: i32, %arg1: i32) -> (i32, i32) {
    %c0_i32 = arith.constant 0 : i32
    %c0_i32_0 = arith.constant 0 : i32
    %c0_i32_1 = arith.constant 0 : i32
    return %c0_i32, %c0_i32_0 : i32, i32
  }
  func.func @transform_5(%arg0: i32, %arg1: i32) -> (i32, i32) {
    %c0_i32 = arith.constant 0 : i32
    %c0_i32_0 = arith.constant 0 : i32
    %c0_i32_1 = arith.constant 0 : i32
    return %c0_i32, %c0_i32_0 : i32, i32
  }
  func.func @transform_6(%arg0: i32, %arg1: i32) -> (i32, i32) {
    %c0_i32 = arith.constant 0 : i32
    %c0_i32_0 = arith.constant 0 : i32
    %c0_i32_1 = arith.constant 0 : i32
    return %c0_i32, %c0_i32_0 : i32, i32
  }
  func.func @transform_7(%arg0: i32, %arg1: i32) -> (i32, i32) {
    %c0_i32 = arith.constant 0 : i32
    %c0_i32_0 = arith.constant 0 : i32
    return %arg0, %c0_i32 : i32, i32
  }
}

</mosaic_0001>

<llo_original>
// kernel: tpu_custom_call.1
$region0: #{tpu_custom_call.1}
  #allocation0 [shape = 'u32[]', space=smem, size = 0x4, offset = 0x4, fixed_abs, tag = 'smem constant byte address 0x4 - core index']
  #allocation1 [shape = 'u32[144,128]{1,0:T(1,128)}', space=vmem, size = 0x12000, scoped, tag = 'internal scratch']
  #allocation2 [shape = 'f32[8,1]{1,0:T(8,128)}', space=vmem, size = 0x1000, scoped, tag = 'scratch operand']
  #allocation3 [shape = 'f32[8,1]{1,0:T(8,128)}', space=vmem, size = 0x1000, scoped, tag = 'scratch operand']
  #allocation4 [shape = 'f32[8,32]{1,0:T(8,128)}', space=vmem, size = 0x1000, scoped, tag = 'scratch operand']
  #allocation5 [shape = 'f32[1,1]{1,0:T(1,128)S(6)}', space=smem, size = 0x200, scoped, tag = 'scoped memory for tpu_custom_call.1']
  %s0 = inlined_call_operand.hbm [shape: f32[8,8,32], index: 0, kind: input, shape index: {}]
  %s1 = inlined_call_operand.vmem [shape: f32[1,32], index: 1, kind: input, shape index: {}]
  %s2 = inlined_call_operand.<no memory space> [shape: f32[1,1], index: 2, kind: input, shape index: {}]
  %s3 = inlined_call_operand.hbm [shape: f32[32,32], index: 3, kind: input, shape index: {}]
  %s4 = inlined_call_operand.vmem [shape: f32[1,32], index: 4, kind: input, shape index: {}]
  %s5 = inlined_call_operand.hbm [shape: f32[32,128], index: 5, kind: input, shape index: {}]
  %s6 = inlined_call_operand.vmem [shape: f32[1,128], index: 6, kind: input, shape index: {}]
  %s7 = inlined_call_operand.hbm [shape: f32[8,128], index: 7, kind: output, shape index: {}]
  %s8 = sld [smem:[#allocation0]]
  $region58: #{tpu_custom_call.1} parent=0
    _
  %s10 = ssub.s32 1, %s8
  %s11 = scalar_select 0, %s10, %s8
  %12 = sst [smem:[#allocation5]] %s2
  $region1: #{tpu_custom_call.1} parent=0
    #allocation6 [shape = 'u8[32768]{0}', space=vmem, size = 0x8000, scoped, tag = 'input window, operand 0, single buffered']
    #allocation7 [shape = 's32[1]{0}', space=sflag, size = 0x4, scoped, tag = 'scoped memory for tpu_custom_call.1']
    #allocation8 [shape = 's32[1]{0}', space=sflag, size = 0x4, scoped, tag = 'scoped memory for tpu_custom_call.1']
    #allocation9 [shape = 'u8[16384]{0}', space=vmem, size = 0x4000, scoped, tag = 'input window, operand 3, single buffered']
    #allocation10 [shape = 's32[1]{0}', space=sflag, size = 0x4, scoped, tag = 'scoped memory for tpu_custom_call.1']
    #allocation11 [shape = 'u8[16384]{0}', space=vmem, size = 0x4000, scoped, tag = 'input window, operand 5, single buffered']
    #allocation12 [shape = 'u8[4096]{0}', space=vmem, size = 0x1000, scoped, tag = 'output window, operand 0, single buffered']
    %13 = vsyncpa [#allocation7], 0
    %14 = vsyncpa [#allocation10], 0
    %15 = vsyncpa [#allocation8], 0
    // Predicated region
    $region2: #{tpu_custom_call.1} parent=1 // pred_check
      _
    $region3: #{tpu_custom_call.1} parent=1 // pred_check_branch
      %17 = sbr.rel (0) target = $region5
    $region4: #{tpu_custom_call.1} parent=1 // pred_region
      %s19 = ssub.s32 1024, 1024
      %20 = vsyncadd [#allocation7], %s19
      %s21 = sshll.u32 [#allocation6], 4
      %s22 = int_to_ptr.vmem [resolvable:$true] %s21
      %27 = dma.hbm_to_vmem [thread:$0]  %s0, 1024, %s22, [#allocation7], 128, 128, 8
    $region5: #{tpu_custom_call.1} parent=1 // pred_fallthru
      _
    // Predicated region
    $region6: #{tpu_custom_call.1} parent=1 // pred_check
      _
    $region7: #{tpu_custom_call.1} parent=1 // pred_check_branch
      %29 = sbr.rel (0) target = $region9
    $region8: #{tpu_custom_call.1} parent=1 // pred_region
      _
    $region9: #{tpu_custom_call.1} parent=1 // pred_fallthru
      _
    // Predicated region
    $region10: #{tpu_custom_call.1} parent=1 // pred_check
      _
    $region11: #{tpu_custom_call.1} parent=1 // pred_check_branch
      %31 = sbr.rel (0) target = $region13
    $region12: #{tpu_custom_call.1} parent=1 // pred_region
      _
    $region13: #{tpu_custom_call.1} parent=1 // pred_fallthru
      _
    // Predicated region
    $region14: #{tpu_custom_call.1} parent=1 // pred_check
      _
    $region15: #{tpu_custom_call.1} parent=1 // pred_check_branch
      %33 = sbr.rel (0) target = $region17
    $region16: #{tpu_custom_call.1} parent=1 // pred_region
      %s35 = ssub.s32 512, 512
      %36 = vsyncadd [#allocation10], %s35
      %s37 = sshll.u32 [#allocation9], 4
      %s38 = int_to_ptr.vmem [resolvable:$true] %s37
      %43 = dma.hbm_to_vmem [thread:$0]  %s3, 512, %s38, [#allocation10], 128, 128, 8
    $region17: #{tpu_custom_call.1} parent=1 // pred_fallthru
      _
    // Predicated region
    $region18: #{tpu_custom_call.1} parent=1 // pred_check
      _
    $region19: #{tpu_custom_call.1} parent=1 // pred_check_branch
      %45 = sbr.rel (0) target = $region21
    $region20: #{tpu_custom_call.1} parent=1 // pred_region
      _
    $region21: #{tpu_custom_call.1} parent=1 // pred_fallthru
      _
    // Predicated region
    $region22: #{tpu_custom_call.1} parent=1 // pred_check
      _
    $region23: #{tpu_custom_call.1} parent=1 // pred_check_branch
      %47 = sbr.rel (0) target = $region25
    $region24: #{tpu_custom_call.1} parent=1 // pred_region
      %s49 = ssub.s32 512, 512
      %50 = vsyncadd [#allocation10], %s49
      %s51 = sshll.u32 [#allocation11], 4
      %s52 = int_to_ptr.vmem [resolvable:$true] %s51
      %57 = dma.hbm_to_vmem [thread:$0]  %s5, 512, %s52, [#allocation10], 128, 128, 8
    $region25: #{tpu_custom_call.1} parent=1 // pred_fallthru
      _
    // Predicated region
    $region26: #{tpu_custom_call.1} parent=1 // pred_check
      _
    $region27: #{tpu_custom_call.1} parent=1 // pred_check_branch
      %59 = sbr.rel (0) target = $region29
    $region28: #{tpu_custom_call.1} parent=1 // pred_region
      _
    $region29: #{tpu_custom_call.1} parent=1 // pred_fallthru
      _
    // Predicated region
    $region30: #{tpu_custom_call.1} parent=1 // pred_check
      _
    $region31: #{tpu_custom_call.1} parent=1 // pred_check_branch
      %61 = sbr.rel (0) target = $region33
    $region32: #{tpu_custom_call.1} parent=1 // pred_region
      %62 = dma.done [#allocation7], 1024
    $region33: #{tpu_custom_call.1} parent=1 // pred_fallthru
      _
    // Predicated region
    $region34: #{tpu_custom_call.1} parent=1 // pred_check
      _
    $region35: #{tpu_custom_call.1} parent=1 // pred_check_branch
      %64 = sbr.rel (0) target = $region37
    $region36: #{tpu_custom_call.1} parent=1 // pred_region
      %65 = dma.done [#allocation10], 512
    $region37: #{tpu_custom_call.1} parent=1 // pred_fallthru
      _
    // Predicated region
    $region38: #{tpu_custom_call.1} parent=1 // pred_check
      _
    $region39: #{tpu_custom_call.1} parent=1 // pred_check_branch
      %67 = sbr.rel (0) target = $region41
    $region40: #{tpu_custom_call.1} parent=1 // pred_region
      %68 = dma.done [#allocation10], 512
    $region41: #{tpu_custom_call.1} parent=1 // pred_fallthru
      _
    %p69 = scmp.eq.s32.totalorder 0, 0
    // Predicated region
    $region42: #{tpu_custom_call.1} parent=1 // pred_check
      %p70 = pneg %p69
    $region43: #{tpu_custom_call.1} parent=1 // pred_check_branch
      %72 = sbr.rel (%p70) target = $region45
    $region44: #{tpu_custom_call.1} parent=1 // pred_region
      %vm73 = vcmask 7168
      %74 = vst.msk [vmem:[#allocation2] sm:$0xff] %vm73, -inf
      %75 = vst.msk [vmem:[#allocation3] sm:$0xff] %vm73, 0.0
      %vm76 = vcmask 261120
      %77 = vst.msk [vmem:[#allocation4] sm:$0xff] %vm76, 0.0
    $region45: #{tpu_custom_call.1} parent=1 // pred_fallthru
      _
    %v78 = vld [vmem:[#allocation6] sm:$0xff]
    %v79 = vld [vmem:[#allocation6 + $0x8] sm:$0xff]
    %v80 = vld [vmem:[#allocation6 + $0x10] sm:$0xff]
    %v81 = vld [vmem:[#allocation6 + $0x18] sm:$0xff]
    %v82 = vld [vmem:[#allocation6 + $0x20] sm:$0xff]
    %v83 = vld [vmem:[#allocation6 + $0x28] sm:$0xff]
    %v84 = vld [vmem:[#allocation6 + $0x30] sm:$0xff]
    %v85 = vld [vmem:[#allocation6 + $0x38] sm:$0xff]
    %v86 = vld [vmem:[%s1] sm:$0x1]
    %v88 = vlaneseq
    %v89 = vshrl.u32 %v88, 7
    %v90 = vsub.s32 0, %v89
    %v91 = vrot.slane %v86, %v90
    %v93 = vmul.f32 %v78, %v91
    %v94 = vmul.f32 %v79, %v91
    %v95 = vmul.f32 %v80, %v91
    %v96 = vmul.f32 %v81, %v91
    %v97 = vmul.f32 %v82, %v91
    %v98 = vmul.f32 %v83, %v91
    %v99 = vmul.f32 %v84, %v91
    %v100 = vmul.f32 %v85, %v91
    %vm101 = vcmask 261120
    %v102 = vsel %vm101, %v93, 0.0
    %103 = vadd.xlane.f32.xlu0 %v102
    %v104 = vpop.xlane.xlu0 %103
    %v105 = vsel %vm101, %v94, 0.0
    %106 = vadd.xlane.f32.xlu0 %v105
    %v107 = vpop.xlane.xlu0 %106
    %v108 = vsel %vm101, %v95, 0.0
    %109 = vadd.xlane.f32.xlu0 %v108
    %v110 = vpop.xlane.xlu0 %109
    %v111 = vsel %vm101, %v96, 0.0
    %112 = vadd.xlane.f32.xlu0 %v111
    %v113 = vpop.xlane.xlu0 %112
    %v114 = vsel %vm101, %v97, 0.0
    %115 = vadd.xlane.f32.xlu0 %v114
    %v116 = vpop.xlane.xlu0 %115
    %v117 = vsel %vm101, %v98, 0.0
    %118 = vadd.xlane.f32.xlu0 %v117
    %v119 = vpop.xlane.xlu0 %118
    %v120 = vsel %vm101, %v99, 0.0
    %121 = vadd.xlane.f32.xlu0 %v120
    %v122 = vpop.xlane.xlu0 %121
    %v123 = vsel %vm101, %v100, 0.0
    %124 = vadd.xlane.f32.xlu0 %v123
    %v125 = vpop.xlane.xlu0 %124
    %s126 = sld [smem:[#allocation5]]
    %v127 = vstv %s126
    %v128 = vadd.f32 %v104, %v127
    %v129 = vadd.f32 %v107, %v127
    %v130 = vadd.f32 %v110, %v127
    %v131 = vadd.f32 %v113, %v127
    %v132 = vadd.f32 %v116, %v127
    %v133 = vadd.f32 %v119, %v127
    %v134 = vadd.f32 %v122, %v127
    %v135 = vadd.f32 %v125, %v127
    %v136 = vld [vmem:[#allocation2] sm:$0xff]
    %v145 = vlaneseq
    %v146 = vand.u32 %v145, 127
    %v147 = vlaneseq
    %v148 = vshrl.u32 %v147, 7
    %v149 = vsub.s32 %v146, %v148
    %v150 = vrot.slane %v128, %v149
    %v151 = vlaneseq
    %v152 = vshrl.u32 %v151, 7
    %v153 = vsub.s32 %v146, %v152
    %v154 = vrot.slane %v129, %v153
    %v155 = vlaneseq
    %v156 = vshrl.u32 %v155, 7
    %v157 = vsub.s32 %v146, %v156
    %v158 = vrot.slane %v130, %v157
    %v159 = vlaneseq
    %v160 = vshrl.u32 %v159, 7
    %v161 = vsub.s32 %v146, %v160
    %v162 = vrot.slane %v131, %v161
    %v163 = vlaneseq
    %v164 = vshrl.u32 %v163, 7
    %v165 = vsub.s32 %v146, %v164
    %v166 = vrot.slane %v132, %v165
    %v167 = vlaneseq
    %v168 = vshrl.u32 %v167, 7
    %v169 = vsub.s32 %v146, %v168
    %v170 = vrot.slane %v133, %v169
    %v171 = vlaneseq
    %v172 = vshrl.u32 %v171, 7
    %v173 = vsub.s32 %v146, %v172
    %v174 = vrot.slane %v134, %v173
    %v175 = vlaneseq
    %v176 = vshrl.u32 %v175, 7
    %v177 = vsub.s32 %v146, %v176
    %v178 = vrot.slane %v135, %v177
    %vm179 = vcmask 1041409
    %v180 = vsel %vm179, %v154, %v150
    %vm181 = vcmask 1042434
    %v182 = vsel %vm181, %v158, %v180
    %vm183 = vcmask 1043459
    %v184 = vsel %vm183, %v162, %v182
    %vm185 = vcmask 1044484
    %v186 = vsel %vm185, %v166, %v184
    %vm187 = vcmask 1045509
    %v188 = vsel %vm187, %v170, %v186
    %vm189 = vcmask 1046534
    %v190 = vsel %vm189, %v174, %v188
    %vm191 = vcmask 1047559
    %v192 = vsel %vm191, %v178, %v190
    %vm194 = vcmask 64512
    %v195 = vsel %vm194, %v192, -inf
    %196 = vmax.xlane.f32.xlu0 %v195
    %v197 = vpop.xlane.xlu0 %196
    %v198 = vmax.f32 %v136, %v197
    %v199 = vsub.f32 %v136, %v198
    %v200 = vmul.f32 %v199, 1.442695
    %v201 = vpow.pop %v200
    %203 = vset.pattern.permute.xlu0 0
    %204 = vperm.xlu0 %203, %v198
    %v205 = vpop.permute.xlu0 %204
    %v206 = vlaneseq
    %v207 = vshrl.u32 %v206, 7
    %v208 = vsub.s32 0, %v207
    %v209 = vrot.slane %v205, %v208
    %v210 = vlaneseq
    %v211 = vshrl.u32 %v210, 7
    %v212 = vsub.s32 1, %v211
    %v213 = vrot.slane %v205, %v212
    %v214 = vlaneseq
    %v215 = vshrl.u32 %v214, 7
    %v216 = vsub.s32 2, %v215
    %v217 = vrot.slane %v205, %v216
    %v218 = vlaneseq
    %v219 = vshrl.u32 %v218, 7
    %v220 = vsub.s32 3, %v219
    %v221 = vrot.slane %v205, %v220
    %v222 = vlaneseq
    %v223 = vshrl.u32 %v222, 7
    %v224 = vsub.s32 4, %v223
    %v225 = vrot.slane %v205, %v224
    %v226 = vlaneseq
    %v227 = vshrl.u32 %v226, 7
    %v228 = vsub.s32 5, %v227
    %v229 = vrot.slane %v205, %v228
    %v230 = vlaneseq
    %v231 = vshrl.u32 %v230, 7
    %v232 = vsub.s32 6, %v231
    %v233 = vrot.slane %v205, %v232
    %v234 = vlaneseq
    %v235 = vshrl.u32 %v234, 7
    %v236 = vsub.s32 7, %v235
    %v237 = vrot.slane %v205, %v236
    %v246 = vsub.f32 %v128, %v209
    %v247 = vsub.f32 %v129, %v213
    %v248 = vsub.f32 %v130, %v217
    %v249 = vsub.f32 %v131, %v221
    %v250 = vsub.f32 %v132, %v225
    %v251 = vsub.f32 %v133, %v229
    %v252 = vsub.f32 %v134, %v233
    %v253 = vsub.f32 %v135, %v237
    %v254 = vmul.f32 %v246, 1.442695
    %v255 = vpow.pop %v254
    %v256 = vmul.f32 %v247, 1.442695
    %v257 = vpow.pop %v256
    %v258 = vmul.f32 %v248, 1.442695
    %v259 = vpow.pop %v258
    %v260 = vmul.f32 %v249, 1.442695
    %v261 = vpow.pop %v260
    %v262 = vmul.f32 %v250, 1.442695
    %v263 = vpow.pop %v262
    %v264 = vmul.f32 %v251, 1.442695
    %v265 = vpow.pop %v264
    %v266 = vmul.f32 %v252, 1.442695
    %v267 = vpow.pop %v266
    %v268 = vmul.f32 %v253, 1.442695
    %v269 = vpow.pop %v268
    %v270 = vld [vmem:[#allocation3] sm:$0xff]
    %v271 = vmul.f32 %v201, %v270
    %280 = vset.pattern.permute.xlu0 0
    %281 = vperm.xlu0 %280, %v255
    %v282 = vpop.permute.xlu0 %281
    %283 = vset.pattern.permute.xlu0 0
    %284 = vperm.xlu0 %283, %v257
    %v285 = vpop.permute.xlu0 %284
    %286 = vset.pattern.permute.xlu0 0
    %287 = vperm.xlu0 %286, %v259
    %v288 = vpop.permute.xlu0 %287
    %289 = vset.pattern.permute.xlu0 0
    %290 = vperm.xlu0 %289, %v261
    %v291 = vpop.permute.xlu0 %290
    %292 = vset.pattern.permute.xlu0 0
    %293 = vperm.xlu0 %292, %v263
    %v294 = vpop.permute.xlu0 %293
    %295 = vset.pattern.permute.xlu0 0
    %296 = vperm.xlu0 %295, %v265
    %v297 = vpop.permute.xlu0 %296
    %298 = vset.pattern.permute.xlu0 0
    %299 = vperm.xlu0 %298, %v267
    %v300 = vpop.permute.xlu0 %299
    %301 = vset.pattern.permute.xlu0 0
    %302 = vperm.xlu0 %301, %v269
    %v303 = vpop.permute.xlu0 %302
    %v304 = vlaneseq
    %v305 = vshrl.u32 %v304, 7
    %v306 = vsub.s32 %v146, %v305
    %v307 = vrot.slane %v282, %v306
    %v308 = vlaneseq
    %v309 = vshrl.u32 %v308, 7
    %v310 = vsub.s32 %v146, %v309
    %v311 = vrot.slane %v285, %v310
    %v312 = vlaneseq
    %v313 = vshrl.u32 %v312, 7
    %v314 = vsub.s32 %v146, %v313
    %v315 = vrot.slane %v288, %v314
    %v316 = vlaneseq
    %v317 = vshrl.u32 %v316, 7
    %v318 = vsub.s32 %v146, %v317
    %v319 = vrot.slane %v291, %v318
    %v320 = vlaneseq
    %v321 = vshrl.u32 %v320, 7
    %v322 = vsub.s32 %v146, %v321
    %v323 = vrot.slane %v294, %v322
    %v324 = vlaneseq
    %v325 = vshrl.u32 %v324, 7
    %v326 = vsub.s32 %v146, %v325
    %v327 = vrot.slane %v297, %v326
    %v328 = vlaneseq
    %v329 = vshrl.u32 %v328, 7
    %v330 = vsub.s32 %v146, %v329
    %v331 = vrot.slane %v300, %v330
    %v332 = vlaneseq
    %v333 = vshrl.u32 %v332, 7
    %v334 = vsub.s32 %v146, %v333
    %v335 = vrot.slane %v303, %v334
    %v336 = vsel %vm179, %v311, %v307
    %v337 = vsel %vm181, %v315, %v336
    %v338 = vsel %vm183, %v319, %v337
    %v339 = vsel %vm185, %v323, %v338
    %v340 = vsel %vm187, %v327, %v339
    %v341 = vsel %vm189, %v331, %v340
    %v342 = vsel %vm191, %v335, %v341
    %v344 = vsel %vm194, %v342, 0.0
    %345 = vadd.xlane.f32.xlu0 %v344
    %v346 = vpop.xlane.xlu0 %345
    %v347 = vadd.f32 %v271, %v346
    %vm348 = vcmask 7168
    %349 = vst.msk [vmem:[#allocation3] sm:$0xff] %vm348, %v347
    %v358 = vmul.f32 %v282, %v78
    %v359 = vmul.f32 %v285, %v79
    %v360 = vmul.f32 %v288, %v80
    %v361 = vmul.f32 %v291, %v81
    %v362 = vmul.f32 %v294, %v82
    %v363 = vmul.f32 %v297, %v83
    %v364 = vmul.f32 %v300, %v84
    %v365 = vmul.f32 %v303, %v85
    %v366 = vsel %vm101, %v358, 0.0
    %v367 = vrot.slane %v366, 4
    %v368 = vadd.f32 %v366, %v367
    %v369 = vrot.slane %v368, 2
    %v370 = vadd.f32 %v368, %v369
    %v371 = vrot.slane %v370, 1
    %v372 = vadd.f32 %v370, %v371
    %v373 = vsel %vm101, %v359, 0.0
    %v374 = vrot.slane %v373, 4
    %v375 = vadd.f32 %v373, %v374
    %v376 = vrot.slane %v375, 2
    %v377 = vadd.f32 %v375, %v376
    %v378 = vrot.slane %v377, 1
    %v379 = vadd.f32 %v377, %v378
    %v380 = vsel %vm101, %v360, 0.0
    %v381 = vrot.slane %v380, 4
    %v382 = vadd.f32 %v380, %v381
    %v383 = vrot.slane %v382, 2
    %v384 = vadd.f32 %v382, %v383
    %v385 = vrot.slane %v384, 1
    %v386 = vadd.f32 %v384, %v385
    %v387 = vsel %vm101, %v361, 0.0
    %v388 = vrot.slane %v387, 4
    %v389 = vadd.f32 %v387, %v388
    %v390 = vrot.slane %v389, 2
    %v391 = vadd.f32 %v389, %v390
    %v392 = vrot.slane %v391, 1
    %v393 = vadd.f32 %v391, %v392
    %v394 = vsel %vm101, %v362, 0.0
    %v395 = vrot.slane %v394, 4
    %v396 = vadd.f32 %v394, %v395
    %v397 = vrot.slane %v396, 2
    %v398 = vadd.f32 %v396, %v397
    %v399 = vrot.slane %v398, 1
    %v400 = vadd.f32 %v398, %v399
    %v401 = vsel %vm101, %v363, 0.0
    %v402 = vrot.slane %v401, 4
    %v403 = vadd.f32 %v401, %v402
    %v404 = vrot.slane %v403, 2
    %v405 = vadd.f32 %v403, %v404
    %v406 = vrot.slane %v405, 1
    %v407 = vadd.f32 %v405, %v406
    %v408 = vsel %vm101, %v364, 0.0
    %v409 = vrot.slane %v408, 4
    %v410 = vadd.f32 %v408, %v409
    %v411 = vrot.slane %v410, 2
    %v412 = vadd.f32 %v410, %v411
    %v413 = vrot.slane %v412, 1
    %v414 = vadd.f32 %v412, %v413
    %v415 = vsel %vm101, %v365, 0.0
    %v416 = vrot.slane %v415, 4
    %v417 = vadd.f32 %v415, %v416
    %v418 = vrot.slane %v417, 2
    %v419 = vadd.f32 %v417, %v418
    %v420 = vrot.slane %v419, 1
    %v421 = vadd.f32 %v419, %v420
    %v422 = vld [vmem:[#allocation4] sm:$0xff]
    %424 = vset.pattern.permute.xlu0 0
    %425 = vperm.xlu0 %424, %v201
    %v426 = vpop.permute.xlu0 %425
    %v428 = vmul.f32 %v426, %v422
    %v437 = vsel %vm179, %v379, %v372
    %v438 = vsel %vm181, %v386, %v437
    %v439 = vsel %vm183, %v393, %v438
    %v440 = vsel %vm185, %v400, %v439
    %v441 = vsel %vm187, %v407, %v440
    %v442 = vsel %vm189, %v414, %v441
    %v443 = vsel %vm191, %v421, %v442
    %v445 = vadd.f32 %v428, %v443
    %446 = vst.msk [vmem:[#allocation4] sm:$0xff] %vm101, %v445
    %447 = vst.msk [vmem:[#allocation2] sm:$0xff] %vm348, %v198
    // Predicated region
    $region46: #{tpu_custom_call.1} parent=1 // pred_check
      %p448 = pneg %p69
    $region47: #{tpu_custom_call.1} parent=1 // pred_check_branch
      %450 = sbr.rel (%p448) target = $region49
    $region48: #{tpu_custom_call.1} parent=1 // pred_region
      %v451 = vld [vmem:[#allocation3] sm:$0xff]
      %v452 = vrcp.pop %v451
      %v453 = vld [vmem:[#allocation4] sm:$0xff]
      %455 = vset.pattern.permute.xlu0 0
      %456 = vperm.xlu0 %455, %v452
      %v457 = vpop.permute.xlu0 %456
      %v459 = vmul.f32 %v453, %v457
      %v460 = vld [vmem:[#allocation9] sm:$0xff]
      %v461 = vld [vmem:[#allocation9 + $0x8] sm:$0xff]
      %v462 = vld [vmem:[#allocation9 + $0x10] sm:$0xff]
      %v463 = vld [vmem:[#allocation9 + $0x18] sm:$0xff]
      %v464 = vld [vmem:[%s4] sm:$0x1]
      %v466 = vlaneseq
      %v467 = vshrl.u32 %v466, 7
      %v468 = vsub.s32 0, %v467
      %v469 = vrot.slane %v464, %v468
      %v472 = vsel %vm101, %v459, 0
      %474 = vmatprep.subr.mxu0 0.0
      %475 = vmatpush1.msra.mxu0 %v460
      %476 = vmatprep.subr.mxu0 0.0
      %477 = vmatpush1.msra.mxu0 %v461
      %478 = vmatprep.subr.mxu0 0.0
      %479 = vmatpush1.msra.mxu0 %v462
      %480 = vmatprep.subr.mxu0 0.0
      %481 = vmatpush1.msra.mxu0 %v463
      %482 = vmatprep.subr.mxu0 0.0
      %483 = vmatpush1.msra.mxu0 0.0
      %484 = vmatprep.subr.mxu0 0.0
      %485 = vmatpush1.msra.mxu0 0.0
      %486 = vmatprep.subr.mxu0 0.0
      %487 = vmatpush1.msra.mxu0 0.0
      %488 = vmatprep.subr.mxu0 0.0
      %489 = vmatpush1.msra.mxu0 0.0
      %490 = vmatprep.subr.mxu0 0.0
      %491 = vmatpush1.msra.mxu0 0.0
      %492 = vmatprep.subr.mxu0 0.0
      %493 = vmatpush1.msra.mxu0 0.0
      %494 = vmatprep.subr.mxu0 0.0
      %495 = vmatpush1.msra.mxu0 0.0
      %496 = vmatprep.subr.mxu0 0.0
      %497 = vmatpush1.msra.mxu0 0.0
      %498 = vmatprep.subr.mxu0 0.0
      %499 = vmatpush1.msra.mxu0 0.0
      %500 = vmatprep.subr.mxu0 0.0
      %501 = vmatpush1.msra.mxu0 0.0
      %502 = vmatprep.subr.mxu0 0.0
      %503 = vmatpush1.msra.mxu0 0.0
      %504 = vmatprep.subr.mxu0 0.0
      %505 = vmatpush1.msra.mxu0 0.0
      %506 = vmatprep.subr.mxu0 0.0
      %507 = vmatpush1.msra.mxu0 0.0
      %508 = vmatprep.subr.mxu0 0.0
      %509 = vmatpush1.msra.mxu0 0.0
      %510 = vmatprep.subr.mxu0 0.0
      %511 = vmatpush1.msra.mxu0 0.0
      %512 = vmatprep.subr.mxu0 0.0
      %513 = vmatpush1.msra.mxu0 0.0
      %514 = vmatprep.subr.mxu0 0.0
      %515 = vmatpush1.msra.mxu0 0.0
      %516 = vmatprep.subr.mxu0 0.0
      %517 = vmatpush1.msra.mxu0 0.0
      %518 = vmatprep.subr.mxu0 0.0
      %519 = vmatpush1.msra.mxu0 0.0
      %520 = vmatprep.subr.mxu0 0.0
      %521 = vmatpush1.msra.mxu0 0.0
      %522 = vmatprep.subr.mxu0 0.0
      %523 = vmatpush1.msra.mxu0 0.0
      %524 = vmatprep.subr.mxu0 0.0
      %525 = vmatpush1.msra.mxu0 0.0
      %526 = vmatprep.subr.mxu0 0.0
      %527 = vmatpush1.msra.mxu0 0.0
      %528 = vmatprep.subr.mxu0 0.0
      %529 = vmatpush1.msra.mxu0 0.0
      %530 = vmatprep.subr.mxu0 0.0
      %531 = vmatpush1.msra.mxu0 0.0
      %532 = vmatprep.subr.mxu0 0.0
      %533 = vmatpush1.msra.mxu0 0.0
      %534 = vmatprep.subr.mxu0 0.0
      %535 = vmatpush1.msra.mxu0 0.0
      %536 = vmatprep.subr.mxu0 0.0
      %537 = vmatpush1.msra.mxu0 0.0
      %538 = vmatprep.mubr.f32.mxu0 0.0
      %539 = vmatmul.mubr.f32.gmra.mrb[0].mxu0 %v472
      %v540 = vpop.f32.mrb[0].mxu0
      %v541 = vadd.f32 %v469, %v540
      %v542 = vpop.f32.mrb[0].mxu0
      %543 = vdwg.mxu0
      %v544 = vmax.f32 %v541, 0.0
      %v545 = vld [vmem:[#allocation11] sm:$0xff]
      %v546 = vld [vmem:[#allocation11 + $0x8] sm:$0xff]
      %v547 = vld [vmem:[#allocation11 + $0x10] sm:$0xff]
      %v548 = vld [vmem:[#allocation11 + $0x18] sm:$0xff]
      %v549 = vld [vmem:[%s6] sm:$0x1]
      %v551 = vlaneseq
      %v552 = vshrl.u32 %v551, 7
      %v553 = vsub.s32 0, %v552
      %v554 = vrot.slane %v549, %v553
      %v557 = vsel %vm101, %v544, 0
      %559 = vmatprep.subr.mxu0 0.0
      %560 = vmatpush1.msra.mxu0 %v545
      %561 = vmatprep.subr.mxu0 0.0
      %562 = vmatpush1.msra.mxu0 %v546
      %563 = vmatprep.subr.mxu0 0.0
      %564 = vmatpush1.msra.mxu0 %v547
      %565 = vmatprep.subr.mxu0 0.0
      %566 = vmatpush1.msra.mxu0 %v548
      %567 = vmatprep.subr.mxu0 0.0
      %568 = vmatpush1.msra.mxu0 0.0
      %569 = vmatprep.subr.mxu0 0.0
      %570 = vmatpush1.msra.mxu0 0.0
      %571 = vmatprep.subr.mxu0 0.0
      %572 = vmatpush1.msra.mxu0 0.0
      %573 = vmatprep.subr.mxu0 0.0
      %574 = vmatpush1.msra.mxu0 0.0
      %575 = vmatprep.subr.mxu0 0.0
      %576 = vmatpush1.msra.mxu0 0.0
      %577 = vmatprep.subr.mxu0 0.0
      %578 = vmatpush1.msra.mxu0 0.0
      %579 = vmatprep.subr.mxu0 0.0
      %580 = vmatpush1.msra.mxu0 0.0
      %581 = vmatprep.subr.mxu0 0.0
      %582 = vmatpush1.msra.mxu0 0.0
      %583 = vmatprep.subr.mxu0 0.0
      %584 = vmatpush1.msra.mxu0 0.0
      %585 = vmatprep.subr.mxu0 0.0
      %586 = vmatpush1.msra.mxu0 0.0
      %587 = vmatprep.subr.mxu0 0.0
      %588 = vmatpush1.msra.mxu0 0.0
      %589 = vmatprep.subr.mxu0 0.0
      %590 = vmatpush1.msra.mxu0 0.0
      %591 = vmatprep.subr.mxu0 0.0
      %592 = vmatpush1.msra.mxu0 0.0
      %593 = vmatprep.subr.mxu0 0.0
      %594 = vmatpush1.msra.mxu0 0.0
      %595 = vmatprep.subr.mxu0 0.0
      %596 = vmatpush1.msra.mxu0 0.0
      %597 = vmatprep.subr.mxu0 0.0
      %598 = vmatpush1.msra.mxu0 0.0
      %599 = vmatprep.subr.mxu0 0.0
      %600 = vmatpush1.msra.mxu0 0.0
      %601 = vmatprep.subr.mxu0 0.0
      %602 = vmatpush1.msra.mxu0 0.0
      %603 = vmatprep.subr.mxu0 0.0
      %604 = vmatpush1.msra.mxu0 0.0
      %605 = vmatprep.subr.mxu0 0.0
      %606 = vmatpush1.msra.mxu0 0.0
      %607 = vmatprep.subr.mxu0 0.0
      %608 = vmatpush1.msra.mxu0 0.0
      %609 = vmatprep.subr.mxu0 0.0
      %610 = vmatpush1.msra.mxu0 0.0
      %611 = vmatprep.subr.mxu0 0.0
      %612 = vmatpush1.msra.mxu0 0.0
      %613 = vmatprep.subr.mxu0 0.0
      %614 = vmatpush1.msra.mxu0 0.0
      %615 = vmatprep.subr.mxu0 0.0
      %616 = vmatpush1.msra.mxu0 0.0
      %617 = vmatprep.subr.mxu0 0.0
      %618 = vmatpush1.msra.mxu0 0.0
      %619 = vmatprep.subr.mxu0 0.0
      %620 = vmatpush1.msra.mxu0 0.0
      %621 = vmatprep.subr.mxu0 0.0
      %622 = vmatpush1.msra.mxu0 0.0
      %623 = vmatprep.mubr.f32.mxu0 0.0
      %624 = vmatmul.mubr.f32.gmra.mrb[0].mxu0 %v557
      %v625 = vpop.f32.mrb[0].mxu0
      %v626 = vadd.f32 %v554, %v625
      %v627 = vpop.f32.mrb[0].mxu0
      %628 = vdwg.mxu0
      %629 = vst [vmem:[#allocation12] sm:$0xff] %v626
    $region49: #{tpu_custom_call.1} parent=1 // pred_fallthru
      _
    // Predicated region
    $region50: #{tpu_custom_call.1} parent=1 // pred_check
      _
    $region51: #{tpu_custom_call.1} parent=1 // pred_check_branch
      %631 = sbr.rel (0) target = $region53
    $region52: #{tpu_custom_call.1} parent=1 // pred_region
      %s633 = ssub.s32 128, 128
      %634 = vsyncadd [#allocation8], %s633
      %s636 = sshll.u32 [#allocation12], 4
      %s637 = int_to_ptr.vmem [resolvable:$true] %s636
      %639 = dma.vmem_to_hbm [thread:$0]  %s637, 128, %s7, [#allocation8]
    $region53: #{tpu_custom_call.1} parent=1 // pred_fallthru
      _
    // Predicated region
    $region54: #{tpu_custom_call.1} parent=1 // pred_check
      _
    $region55: #{tpu_custom_call.1} parent=1 // pred_check_branch
      %641 = sbr.rel (0) target = $region57
    $region56: #{tpu_custom_call.1} parent=1 // pred_region
      %642 = dma.done [#allocation8], 128
    $region57: #{tpu_custom_call.1} parent=1 // pred_fallthru
      _
    %643 = vsyncpa [#allocation7], 1
    %644 = vsyncpa [#allocation10], 1
    %645 = vsyncpa [#allocation8], 1

// kernel: tpu_custom_call.1
$region0: #{tpu_custom_call.1}
  #allocation0 [shape = 'u32[]', space=smem, size = 0x4, offset = 0x4, fixed_abs, tag = 'smem constant byte address 0x4 - core index']
  #allocation1 [shape = 'u32[144,128]{1,0:T(1,128)}', space=vmem, size = 0x12000, scoped, tag = 'internal scratch']
  #allocation2 [shape = 'f32[8,1]{1,0:T(8,128)}', space=vmem, size = 0x1000, scoped, tag = 'scratch operand']
  #allocation3 [shape = 'f32[8,1]{1,0:T(8,128)}', space=vmem, size = 0x1000, scoped, tag = 'scratch operand']
  #allocation4 [shape = 'f32[8,32]{1,0:T(8,128)}', space=vmem, size = 0x1000, scoped, tag = 'scratch operand']
  #allocation5 [shape = 'f32[1,1]{1,0:T(1,128)S(6)}', space=smem, size = 0x200, scoped, tag = 'scoped memory for tpu_custom_call.1']
  %s0 = inlined_call_operand.hbm [shape: f32[8,8,32], index: 0, kind: input, shape index: {}]
  %s1 = inlined_call_operand.vmem [shape: f32[1,32], index: 1, kind: input, shape index: {}]
  %s2 = inlined_call_operand.<no memory space> [shape: f32[1,1], index: 2, kind: input, shape index: {}]
  %s3 = inlined_call_operand.hbm [shape: f32[32,32], index: 3, kind: input, shape index: {}]
  %s4 = inlined_call_operand.vmem [shape: f32[1,32], index: 4, kind: input, shape index: {}]
  %s5 = inlined_call_operand.hbm [shape: f32[32,128], index: 5, kind: input, shape index: {}]
  %s6 = inlined_call_operand.vmem [shape: f32[1,128], index: 6, kind: input, shape index: {}]
  %s7 = inlined_call_operand.hbm [shape: f32[8,128], index: 7, kind: output, shape index: {}]
  %s8 = sld [smem:[#allocation0]]
  $region58: #{tpu_custom_call.1} parent=0
    _
  %s10 = ssub.s32 1, %s8
  %s11 = scalar_select 0, %s10, %s8
  %12 = sst [smem:[#allocation5]] %s2
  $region1: #{tpu_custom_call.1} parent=0
    #allocation6 [shape = 'u8[32768]{0}', space=vmem, size = 0x8000, scoped, tag = 'input window, operand 0, single buffered']
    #allocation7 [shape = 's32[1]{0}', space=sflag, size = 0x4, scoped, tag = 'scoped memory for tpu_custom_call.1']
    #allocation8 [shape = 's32[1]{0}', space=sflag, size = 0x4, scoped, tag = 'scoped memory for tpu_custom_call.1']
    #allocation9 [shape = 'u8[16384]{0}', space=vmem, size = 0x4000, scoped, tag = 'input window, operand 3, single buffered']
    #allocation10 [shape = 's32[1]{0}', space=sflag, size = 0x4, scoped, tag = 'scoped memory for tpu_custom_call.1']
    #allocation11 [shape = 'u8[16384]{0}', space=vmem, size = 0x4000, scoped, tag = 'input window, operand 5, single buffered']
    #allocation12 [shape = 'u8[4096]{0}', space=vmem, size = 0x1000, scoped, tag = 'output window, operand 0, single buffered']
    %13 = vsyncpa [#allocation7], 0
    %14 = vsyncpa [#allocation10], 0
    %15 = vsyncpa [#allocation8], 0
    // Predicated region
    $region2: #{tpu_custom_call.1} parent=1 // pred_check
      _
    $region3: #{tpu_custom_call.1} parent=1 // pred_check_branch
      %17 = sbr.rel (0) target = $region5
    $region4: #{tpu_custom_call.1} parent=1 // pred_region
      %s19 = ssub.s32 1024, 1024
      %20 = vsyncadd [#allocation7], %s19
      %s21 = sshll.u32 [#allocation6], 4
      %s22 = int_to_ptr.vmem [resolvable:$true] %s21
      %27 = dma.hbm_to_vmem [thread:$0]  %s0, 1024, %s22, [#allocation7], 128, 128, 8
    $region5: #{tpu_custom_call.1} parent=1 // pred_fallthru
      _
    // Predicated region
    $region6: #{tpu_custom_call.1} parent=1 // pred_check
      _
    $region7: #{tpu_custom_call.1} parent=1 // pred_check_branch
      %29 = sbr.rel (0) target = $region9
    $region8: #{tpu_custom_call.1} parent=1 // pred_region
      _
    $region9: #{tpu_custom_call.1} parent=1 // pred_fallthru
      _
    // Predicated region
    $region10: #{tpu_custom_call.1} parent=1 // pred_check
      _
    $region11: #{tpu_custom_call.1} parent=1 // pred_check_branch
      %31 = sbr.rel (0) target = $region13
    $region12: #{tpu_custom_call.1} parent=1 // pred_region
      _
    $region13: #{tpu_custom_call.1} parent=1 // pred_fallthru
      _
    // Predicated region
    $region14: #{tpu_custom_call.1} parent=1 // pred_check
      _
    $region15: #{tpu_custom_call.1} parent=1 // pred_check_branch
      %33 = sbr.rel (0) target = $region17
    $region16: #{tpu_custom_call.1} parent=1 // pred_region
      %s35 = ssub.s32 512, 512
      %36 = vsyncadd [#allocation10], %s35
      %s37 = sshll.u32 [#allocation9], 4
      %s38 = int_to_ptr.vmem [resolvable:$true] %s37
      %43 = dma.hbm_to_vmem [thread:$0]  %s3, 512, %s38, [#allocation10], 128, 128, 8
    $region17: #{tpu_custom_call.1} parent=1 // pred_fallthru
      _
    // Predicated region
    $region18: #{tpu_custom_call.1} parent=1 // pred_check
      _
    $region19: #{tpu_custom_call.1} parent=1 // pred_check_branch
      %45 = sbr.rel (0) target = $region21
    $region20: #{tpu_custom_call.1} parent=1 // pred_region
      _
    $region21: #{tpu_custom_call.1} parent=1 // pred_fallthru
      _
    // Predicated region
    $region22: #{tpu_custom_call.1} parent=1 // pred_check
      _
    $region23: #{tpu_custom_call.1} parent=1 // pred_check_branch
      %47 = sbr.rel (0) target = $region25
    $region24: #{tpu_custom_call.1} parent=1 // pred_region
      %s49 = ssub.s32 512, 512
      %50 = vsyncadd [#allocation10], %s49
      %s51 = sshll.u32 [#allocation11], 4
      %s52 = int_to_ptr.vmem [resolvable:$true] %s51
      %57 = dma.hbm_to_vmem [thread:$0]  %s5, 512, %s52, [#allocation10], 128, 128, 8
    $region25: #{tpu_custom_call.1} parent=1 // pred_fallthru
      _
    // Predicated region
    $region26: #{tpu_custom_call.1} parent=1 // pred_check
      _
    $region27: #{tpu_custom_call.1} parent=1 // pred_check_branch
      %59 = sbr.rel (0) target = $region29
    $region28: #{tpu_custom_call.1} parent=1 // pred_region
      _
    $region29: #{tpu_custom_call.1} parent=1 // pred_fallthru
      _
    // Predicated region
    $region30: #{tpu_custom_call.1} parent=1 // pred_check
      _
    $region31: #{tpu_custom_call.1} parent=1 // pred_check_branch
      %61 = sbr.rel (0) target = $region33
    $region32: #{tpu_custom_call.1} parent=1 // pred_region
      %62 = dma.done [#allocation7], 1024
    $region33: #{tpu_custom_call.1} parent=1 // pred_fallthru
      _
    // Predicated region
    $region34: #{tpu_custom_call.1} parent=1 // pred_check
      _
    $region35: #{tpu_custom_call.1} parent=1 // pred_check_branch
      %64 = sbr.rel (0) target = $region37
    $region36: #{tpu_custom_call.1} parent=1 // pred_region
      %65 = dma.done [#allocation10], 512
    $region37: #{tpu_custom_call.1} parent=1 // pred_fallthru
      _
    // Predicated region
    $region38: #{tpu_custom_call.1} parent=1 // pred_check
      _
    $region39: #{tpu_custom_call.1} parent=1 // pred_check_branch
      %67 = sbr.rel (0) target = $region41
    $region40: #{tpu_custom_call.1} parent=1 // pred_region
      %68 = dma.done [#allocation10], 512
    $region41: #{tpu_custom_call.1} parent=1 // pred_fallthru
      _
    %p69 = scmp.eq.s32.totalorder 0, 0
    // Predicated region
    $region42: #{tpu_custom_call.1} parent=1 // pred_check
      %p70 = pneg %p69
    $region43: #{tpu_custom_call.1} parent=1 // pred_check_branch
      %72 = sbr.rel (%p70) target = $region45
    $region44: #{tpu_custom_call.1} parent=1 // pred_region
      %vm73 = vcmask 7168
      %74 = vst.msk [vmem:[#allocation2] sm:$0xff] %vm73, -inf
      %75 = vst.msk [vmem:[#allocation3] sm:$0xff] %vm73, 0.0
      %vm76 = vcmask 261120
      %77 = vst.msk [vmem:[#allocation4] sm:$0xff] %vm76, 0.0
    $region45: #{tpu_custom_call.1} parent=1 // pred_fallthru
      _
    %v78 = vld [vmem:[#allocation6] sm:$0xff]
    %v79 = vld [vmem:[#allocation6 + $0x8] sm:$0xff]
    %v80 = vld [vmem:[#allocation6 + $0x10] sm:$0xff]
    %v81 = vld [vmem:[#allocation6 + $0x18] sm:$0xff]
    %v82 = vld [vmem:[#allocation6 + $0x20] sm:$0xff]
    %v83 = vld [vmem:[#allocation6 + $0x28] sm:$0xff]
    %v84 = vld [vmem:[#allocation6 + $0x30] sm:$0xff]
    %v85 = vld [vmem:[#allocation6 + $0x38] sm:$0xff]
    %v86 = vld [vmem:[%s1] sm:$0x1]
    %v88 = vlaneseq
    %v89 = vshrl.u32 %v88, 7
    %v90 = vsub.s32 0, %v89
    %v91 = vrot.slane %v86, %v90
    %v93 = vmul.f32 %v78, %v91
    %v94 = vmul.f32 %v79, %v91
    %v95 = vmul.f32 %v80, %v91
    %v96 = vmul.f32 %v81, %v91
    %v97 = vmul.f32 %v82, %v91
    %v98 = vmul.f32 %v83, %v91
    %v99 = vmul.f32 %v84, %v91
    %v100 = vmul.f32 %v85, %v91
    %vm101 = vcmask 261120
    %v102 = vsel %vm101, %v93, 0.0
    %103 = vadd.xlane.f32.xlu0 %v102
    %v104 = vpop.xlane.xlu0 %103
    %v105 = vsel %vm101, %v94, 0.0
    %106 = vadd.xlane.f32.xlu0 %v105
    %v107 = vpop.xlane.xlu0 %106
    %v108 = vsel %vm101, %v95, 0.0
    %109 = vadd.xlane.f32.xlu0 %v108
    %v110 = vpop.xlane.xlu0 %109
    %v111 = vsel %vm101, %v96, 0.0
    %112 = vadd.xlane.f32.xlu0 %v111
    %v113 = vpop.xlane.xlu0 %112
    %v114 = vsel %vm101, %v97, 0.0
    %115 = vadd.xlane.f32.xlu0 %v114
    %v116 = vpop.xlane.xlu0 %115
    %v117 = vsel %vm101, %v98, 0.0
    %118 = vadd.xlane.f32.xlu0 %v117
    %v119 = vpop.xlane.xlu0 %118
    %v120 = vsel %vm101, %v99, 0.0
    %121 = vadd.xlane.f32.xlu0 %v120
    %v122 = vpop.xlane.xlu0 %121
    %v123 = vsel %vm101, %v100, 0.0
    %124 = vadd.xlane.f32.xlu0 %v123
    %v125 = vpop.xlane.xlu0 %124
    %s126 = sld [smem:[#allocation5]]
    %v127 = vstv %s126
    %v128 = vadd.f32 %v104, %v127
    %v129 = vadd.f32 %v107, %v127
    %v130 = vadd.f32 %v110, %v127
    %v131 = vadd.f32 %v113, %v127
    %v132 = vadd.f32 %v116, %v127
    %v133 = vadd.f32 %v119, %v127
    %v134 = vadd.f32 %v122, %v127
    %v135 = vadd.f32 %v125, %v127
    %v136 = vld [vmem:[#allocation2] sm:$0xff]
    %v145 = vlaneseq
    %v146 = vand.u32 %v145, 127
    %v147 = vlaneseq
    %v148 = vshrl.u32 %v147, 7
    %v149 = vsub.s32 %v146, %v148
    %v150 = vrot.slane %v128, %v149
    %v151 = vlaneseq
    %v152 = vshrl.u32 %v151, 7
    %v153 = vsub.s32 %v146, %v152
    %v154 = vrot.slane %v129, %v153
    %v155 = vlaneseq
    %v156 = vshrl.u32 %v155, 7
    %v157 = vsub.s32 %v146, %v156
    %v158 = vrot.slane %v130, %v157
    %v159 = vlaneseq
    %v160 = vshrl.u32 %v159, 7
    %v161 = vsub.s32 %v146, %v160
    %v162 = vrot.slane %v131, %v161
    %v163 = vlaneseq
    %v164 = vshrl.u32 %v163, 7
    %v165 = vsub.s32 %v146, %v164
    %v166 = vrot.slane %v132, %v165
    %v167 = vlaneseq
    %v168 = vshrl.u32 %v167, 7
    %v169 = vsub.s32 %v146, %v168
    %v170 = vrot.slane %v133, %v169
    %v171 = vlaneseq
    %v172 = vshrl.u32 %v171, 7
    %v173 = vsub.s32 %v146, %v172
    %v174 = vrot.slane %v134, %v173
    %v175 = vlaneseq
    %v176 = vshrl.u32 %v175, 7
    %v177 = vsub.s32 %v146, %v176
    %v178 = vrot.slane %v135, %v177
    %vm179 = vcmask 1041409
    %v180 = vsel %vm179, %v154, %v150
    %vm181 = vcmask 1042434
    %v182 = vsel %vm181, %v158, %v180
    %vm183 = vcmask 1043459
    %v184 = vsel %vm183, %v162, %v182
    %vm185 = vcmask 1044484
    %v186 = vsel %vm185, %v166, %v184
    %vm187 = vcmask 1045509
    %v188 = vsel %vm187, %v170, %v186
    %vm189 = vcmask 1046534
    %v190 = vsel %vm189, %v174, %v188
    %vm191 = vcmask 1047559
    %v192 = vsel %vm191, %v178, %v190
    %vm194 = vcmask 64512
    %v195 = vsel %vm194, %v192, -inf
    %196 = vmax.xlane.f32.xlu0 %v195
    %v197 = vpop.xlane.xlu0 %196
    %v198 = vmax.f32 %v136, %v197
    %v199 = vsub.f32 %v136, %v198
    %v200 = vmul.f32 %v199, 1.442695
    %v201 = vpow.pop %v200
    %203 = vset.pattern.permute.xlu0 0
    %204 = vperm.xlu0 %203, %v198
    %v205 = vpop.permute.xlu0 %204
    %v206 = vlaneseq
    %v207 = vshrl.u32 %v206, 7
    %v208 = vsub.s32 0, %v207
    %v209 = vrot.slane %v205, %v208
    %v210 = vlaneseq
    %v211 = vshrl.u32 %v210, 7
    %v212 = vsub.s32 1, %v211
    %v213 = vrot.slane %v205, %v212
    %v214 = vlaneseq
    %v215 = vshrl.u32 %v214, 7
    %v216 = vsub.s32 2, %v215
    %v217 = vrot.slane %v205, %v216
    %v218 = vlaneseq
    %v219 = vshrl.u32 %v218, 7
    %v220 = vsub.s32 3, %v219
    %v221 = vrot.slane %v205, %v220
    %v222 = vlaneseq
    %v223 = vshrl.u32 %v222, 7
    %v224 = vsub.s32 4, %v223
    %v225 = vrot.slane %v205, %v224
    %v226 = vlaneseq
    %v227 = vshrl.u32 %v226, 7
    %v228 = vsub.s32 5, %v227
    %v229 = vrot.slane %v205, %v228
    %v230 = vlaneseq
    %v231 = vshrl.u32 %v230, 7
    %v232 = vsub.s32 6, %v231
    %v233 = vrot.slane %v205, %v232
    %v234 = vlaneseq
    %v235 = vshrl.u32 %v234, 7
    %v236 = vsub.s32 7, %v235
    %v237 = vrot.slane %v205, %v236
    %v246 = vsub.f32 %v128, %v209
    %v247 = vsub.f32 %v129, %v213
    %v248 = vsub.f32 %v130, %v217
    %v249 = vsub.f32 %v131, %v221
    %v250 = vsub.f32 %v132, %v225
    %v251 = vsub.f32 %v133, %v229
    %v252 = vsub.f32 %v134, %v233
    %v253 = vsub.f32 %v135, %v237
    %v254 = vmul.f32 %v246, 1.442695
    %v255 = vpow.pop %v254
    %v256 = vmul.f32 %v247, 1.442695
    %v257 = vpow.pop %v256
    %v258 = vmul.f32 %v248, 1.442695
    %v259 = vpow.pop %v258
    %v260 = vmul.f32 %v249, 1.442695
    %v261 = vpow.pop %v260
    %v262 = vmul.f32 %v250, 1.442695
    %v263 = vpow.pop %v262
    %v264 = vmul.f32 %v251, 1.442695
    %v265 = vpow.pop %v264
    %v266 = vmul.f32 %v252, 1.442695
    %v267 = vpow.pop %v266
    %v268 = vmul.f32 %v253, 1.442695
    %v269 = vpow.pop %v268
    %v270 = vld [vmem:[#allocation3] sm:$0xff]
    %v271 = vmul.f32 %v201, %v270
    %280 = vset.pattern.permute.xlu0 0
    %281 = vperm.xlu0 %280, %v255
    %v282 = vpop.permute.xlu0 %281
    %283 = vset.pattern.permute.xlu0 0
    %284 = vperm.xlu0 %283, %v257
    %v285 = vpop.permute.xlu0 %284
    %286 = vset.pattern.permute.xlu0 0
    %287 = vperm.xlu0 %286, %v259
    %v288 = vpop.permute.xlu0 %287
    %289 = vset.pattern.permute.xlu0 0
    %290 = vperm.xlu0 %289, %v261
    %v291 = vpop.permute.xlu0 %290
    %292 = vset.pattern.permute.xlu0 0
    %293 = vperm.xlu0 %292, %v263
    %v294 = vpop.permute.xlu0 %293
    %295 = vset.pattern.permute.xlu0 0
    %296 = vperm.xlu0 %295, %v265
    %v297 = vpop.permute.xlu0 %296
    %298 = vset.pattern.permute.xlu0 0
    %299 = vperm.xlu0 %298, %v267
    %v300 = vpop.permute.xlu0 %299
    %301 = vset.pattern.permute.xlu0 0
    %302 = vperm.xlu0 %301, %v269
    %v303 = vpop.permute.xlu0 %302
    %v304 = vlaneseq
    %v305 = vshrl.u32 %v304, 7
    %v306 = vsub.s32 %v146, %v305
    %v307 = vrot.slane %v282, %v306
    %v308 = vlaneseq
    %v309 = vshrl.u32 %v308, 7
    %v310 = vsub.s32 %v146, %v309
    %v311 = vrot.slane %v285, %v310
    %v312 = vlaneseq
    %v313 = vshrl.u32 %v312, 7
    %v314 = vsub.s32 %v146, %v313
    %v315 = vrot.slane %v288, %v314
    %v316 = vlaneseq
    %v317 = vshrl.u32 %v316, 7
    %v318 = vsub.s32 %v146, %v317
    %v319 = vrot.slane %v291, %v318
    %v320 = vlaneseq
    %v321 = vshrl.u32 %v320, 7
    %v322 = vsub.s32 %v146, %v321
    %v323 = vrot.slane %v294, %v322
    %v324 = vlaneseq
    %v325 = vshrl.u32 %v324, 7
    %v326 = vsub.s32 %v146, %v325
    %v327 = vrot.slane %v297, %v326
    %v328 = vlaneseq
    %v329 = vshrl.u32 %v328, 7
    %v330 = vsub.s32 %v146, %v329
    %v331 = vrot.slane %v300, %v330
    %v332 = vlaneseq
    %v333 = vshrl.u32 %v332, 7
    %v334 = vsub.s32 %v146, %v333
    %v335 = vrot.slane %v303, %v334
    %v336 = vsel %vm179, %v311, %v307
    %v337 = vsel %vm181, %v315, %v336
    %v338 = vsel %vm183, %v319, %v337
    %v339 = vsel %vm185, %v323, %v338
    %v340 = vsel %vm187, %v327, %v339
    %v341 = vsel %vm189, %v331, %v340
    %v342 = vsel %vm191, %v335, %v341
    %v344 = vsel %vm194, %v342, 0.0
    %345 = vadd.xlane.f32.xlu0 %v344
    %v346 = vpop.xlane.xlu0 %345
    %v347 = vadd.f32 %v271, %v346
    %vm348 = vcmask 7168
    %349 = vst.msk [vmem:[#allocation3] sm:$0xff] %vm348, %v347
    %v358 = vmul.f32 %v282, %v78
    %v359 = vmul.f32 %v285, %v79
    %v360 = vmul.f32 %v288, %v80
    %v361 = vmul.f32 %v291, %v81
    %v362 = vmul.f32 %v294, %v82
    %v363 = vmul.f32 %v297, %v83
    %v364 = vmul.f32 %v300, %v84
    %v365 = vmul.f32 %v303, %v85
    %v366 = vsel %vm101, %v358, 0.0
    %v367 = vrot.slane %v366, 4
    %v368 = vadd.f32 %v366, %v367
    %v369 = vrot.slane %v368, 2
    %v370 = vadd.f32 %v368, %v369
    %v371 = vrot.slane %v370, 1
    %v372 = vadd.f32 %v370, %v371
    %v373 = vsel %vm101, %v359, 0.0
    %v374 = vrot.slane %v373, 4
    %v375 = vadd.f32 %v373, %v374
    %v376 = vrot.slane %v375, 2
    %v377 = vadd.f32 %v375, %v376
    %v378 = vrot.slane %v377, 1
    %v379 = vadd.f32 %v377, %v378
    %v380 = vsel %vm101, %v360, 0.0
    %v381 = vrot.slane %v380, 4
    %v382 = vadd.f32 %v380, %v381
    %v383 = vrot.slane %v382, 2
    %v384 = vadd.f32 %v382, %v383
    %v385 = vrot.slane %v384, 1
    %v386 = vadd.f32 %v384, %v385
    %v387 = vsel %vm101, %v361, 0.0
    %v388 = vrot.slane %v387, 4
    %v389 = vadd.f32 %v387, %v388
    %v390 = vrot.slane %v389, 2
    %v391 = vadd.f32 %v389, %v390
    %v392 = vrot.slane %v391, 1
    %v393 = vadd.f32 %v391, %v392
    %v394 = vsel %vm101, %v362, 0.0
    %v395 = vrot.slane %v394, 4
    %v396 = vadd.f32 %v394, %v395
    %v397 = vrot.slane %v396, 2
    %v398 = vadd.f32 %v396, %v397
    %v399 = vrot.slane %v398, 1
    %v400 = vadd.f32 %v398, %v399
    %v401 = vsel %vm101, %v363, 0.0
    %v402 = vrot.slane %v401, 4
    %v403 = vadd.f32 %v401, %v402
    %v404 = vrot.slane %v403, 2
    %v405 = vadd.f32 %v403, %v404
    %v406 = vrot.slane %v405, 1
    %v407 = vadd.f32 %v405, %v406
    %v408 = vsel %vm101, %v364, 0.0
    %v409 = vrot.slane %v408, 4
    %v410 = vadd.f32 %v408, %v409
    %v411 = vrot.slane %v410, 2
    %v412 = vadd.f32 %v410, %v411
    %v413 = vrot.slane %v412, 1
    %v414 = vadd.f32 %v412, %v413
    %v415 = vsel %vm101, %v365, 0.0
    %v416 = vrot.slane %v415, 4
    %v417 = vadd.f32 %v415, %v416
    %v418 = vrot.slane %v417, 2
    %v419 = vadd.f32 %v417, %v418
    %v420 = vrot.slane %v419, 1
    %v421 = vadd.f32 %v419, %v420
    %v422 = vld [vmem:[#allocation4] sm:$0xff]
    %424 = vset.pattern.permute.xlu0 0
    %425 = vperm.xlu0 %424, %v201
    %v426 = vpop.permute.xlu0 %425
    %v428 = vmul.f32 %v426, %v422
    %v437 = vsel %vm179, %v379, %v372
    %v438 = vsel %vm181, %v386, %v437
    %v439 = vsel %vm183, %v393, %v438
    %v440 = vsel %vm185, %v400, %v439
    %v441 = vsel %vm187, %v407, %v440
    %v442 = vsel %vm189, %v414, %v441
    %v443 = vsel %vm191, %v421, %v442
    %v445 = vadd.f32 %v428, %v443
    %446 = vst.msk [vmem:[#allocation4] sm:$0xff] %vm101, %v445
    %447 = vst.msk [vmem:[#allocation2] sm:$0xff] %vm348, %v198
    // Predicated region
    $region46: #{tpu_custom_call.1} parent=1 // pred_check
      %p448 = pneg %p69
    $region47: #{tpu_custom_call.1} parent=1 // pred_check_branch
      %450 = sbr.rel (%p448) target = $region49
    $region48: #{tpu_custom_call.1} parent=1 // pred_region
      %v451 = vld [vmem:[#allocation3] sm:$0xff]
      %v452 = vrcp.pop %v451
      %v453 = vld [vmem:[#allocation4] sm:$0xff]
      %455 = vset.pattern.permute.xlu0 0
      %456 = vperm.xlu0 %455, %v452
      %v457 = vpop.permute.xlu0 %456
      %v459 = vmul.f32 %v453, %v457
      %v460 = vld [vmem:[#allocation9] sm:$0xff]
      %v461 = vld [vmem:[#allocation9 + $0x8] sm:$0xff]
      %v462 = vld [vmem:[#allocation9 + $0x10] sm:$0xff]
      %v463 = vld [vmem:[#allocation9 + $0x18] sm:$0xff]
      %v464 = vld [vmem:[%s4] sm:$0x1]
      %v466 = vlaneseq
      %v467 = vshrl.u32 %v466, 7
      %v468 = vsub.s32 0, %v467
      %v469 = vrot.slane %v464, %v468
      %v472 = vsel %vm101, %v459, 0
      %474 = vmatprep.subr.mxu0 0.0
      %475 = vmatpush1.msra.mxu0 %v460
      %476 = vmatprep.subr.mxu0 0.0
      %477 = vmatpush1.msra.mxu0 %v461
      %478 = vmatprep.subr.mxu0 0.0
      %479 = vmatpush1.msra.mxu0 %v462
      %480 = vmatprep.subr.mxu0 0.0
      %481 = vmatpush1.msra.mxu0 %v463
      %482 = vmatprep.subr.mxu0 0.0
      %483 = vmatpush1.msra.mxu0 0.0
      %484 = vmatprep.subr.mxu0 0.0
      %485 = vmatpush1.msra.mxu0 0.0
      %486 = vmatprep.subr.mxu0 0.0
      %487 = vmatpush1.msra.mxu0 0.0
      %488 = vmatprep.subr.mxu0 0.0
      %489 = vmatpush1.msra.mxu0 0.0
      %490 = vmatprep.subr.mxu0 0.0
      %491 = vmatpush1.msra.mxu0 0.0
      %492 = vmatprep.subr.mxu0 0.0
      %493 = vmatpush1.msra.mxu0 0.0
      %494 = vmatprep.subr.mxu0 0.0
      %495 = vmatpush1.msra.mxu0 0.0
      %496 = vmatprep.subr.mxu0 0.0
      %497 = vmatpush1.msra.mxu0 0.0
      %498 = vmatprep.subr.mxu0 0.0
      %499 = vmatpush1.msra.mxu0 0.0
      %500 = vmatprep.subr.mxu0 0.0
      %501 = vmatpush1.msra.mxu0 0.0
      %502 = vmatprep.subr.mxu0 0.0
      %503 = vmatpush1.msra.mxu0 0.0
      %504 = vmatprep.subr.mxu0 0.0
      %505 = vmatpush1.msra.mxu0 0.0
      %506 = vmatprep.subr.mxu0 0.0
      %507 = vmatpush1.msra.mxu0 0.0
      %508 = vmatprep.subr.mxu0 0.0
      %509 = vmatpush1.msra.mxu0 0.0
      %510 = vmatprep.subr.mxu0 0.0
      %511 = vmatpush1.msra.mxu0 0.0
      %512 = vmatprep.subr.mxu0 0.0
      %513 = vmatpush1.msra.mxu0 0.0
      %514 = vmatprep.subr.mxu0 0.0
      %515 = vmatpush1.msra.mxu0 0.0
      %516 = vmatprep.subr.mxu0 0.0
      %517 = vmatpush1.msra.mxu0 0.0
      %518 = vmatprep.subr.mxu0 0.0
      %519 = vmatpush1.msra.mxu0 0.0
      %520 = vmatprep.subr.mxu0 0.0
      %521 = vmatpush1.msra.mxu0 0.0
      %522 = vmatprep.subr.mxu0 0.0
      %523 = vmatpush1.msra.mxu0 0.0
      %524 = vmatprep.subr.mxu0 0.0
      %525 = vmatpush1.msra.mxu0 0.0
      %526 = vmatprep.subr.mxu0 0.0
      %527 = vmatpush1.msra.mxu0 0.0
      %528 = vmatprep.subr.mxu0 0.0
      %529 = vmatpush1.msra.mxu0 0.0
      %530 = vmatprep.subr.mxu0 0.0
      %531 = vmatpush1.msra.mxu0 0.0
      %532 = vmatprep.subr.mxu0 0.0
      %533 = vmatpush1.msra.mxu0 0.0
      %534 = vmatprep.subr.mxu0 0.0
      %535 = vmatpush1.msra.mxu0 0.0
      %536 = vmatprep.subr.mxu0 0.0
      %537 = vmatpush1.msra.mxu0 0.0
      %538 = vmatprep.mubr.f32.mxu0 0.0
      %539 = vmatmul.mubr.f32.gmra.mrb[0].mxu0 %v472
      %v540 = vpop.f32.mrb[0].mxu0
      %v541 = vadd.f32 %v469, %v540
      %v542 = vpop.f32.mrb[0].mxu0
      %543 = vdwg.mxu0
      %v544 = vmax.f32 %v541, 0.0
      %v545 = vld [vmem:[#allocation11] sm:$0xff]
      %v546 = vld [vmem:[#allocation11 + $0x8] sm:$0xff]
      %v547 = vld [vmem:[#allocation11 + $0x10] sm:$0xff]
      %v548 = vld [vmem:[#allocation11 + $0x18] sm:$0xff]
      %v549 = vld [vmem:[%s6] sm:$0x1]
      %v551 = vlaneseq
      %v552 = vshrl.u32 %v551, 7
      %v553 = vsub.s32 0, %v552
      %v554 = vrot.slane %v549, %v553
      %v557 = vsel %vm101, %v544, 0
      %559 = vmatprep.subr.mxu0 0.0
      %560 = vmatpush1.msra.mxu0 %v545
      %561 = vmatprep.subr.mxu0 0.0
      %562 = vmatpush1.msra.mxu0 %v546
      %563 = vmatprep.subr.mxu0 0.0
      %564 = vmatpush1.msra.mxu0 %v547
      %565 = vmatprep.subr.mxu0 0.0
      %566 = vmatpush1.msra.mxu0 %v548
      %567 = vmatprep.subr.mxu0 0.0
      %568 = vmatpush1.msra.mxu0 0.0
      %569 = vmatprep.subr.mxu0 0.0
      %570 = vmatpush1.msra.mxu0 0.0
      %571 = vmatprep.subr.mxu0 0.0
      %572 = vmatpush1.msra.mxu0 0.0
      %573 = vmatprep.subr.mxu0 0.0
      %574 = vmatpush1.msra.mxu0 0.0
      %575 = vmatprep.subr.mxu0 0.0
      %576 = vmatpush1.msra.mxu0 0.0
      %577 = vmatprep.subr.mxu0 0.0
      %578 = vmatpush1.msra.mxu0 0.0
      %579 = vmatprep.subr.mxu0 0.0
      %580 = vmatpush1.msra.mxu0 0.0
      %581 = vmatprep.subr.mxu0 0.0
      %582 = vmatpush1.msra.mxu0 0.0
      %583 = vmatprep.subr.mxu0 0.0
      %584 = vmatpush1.msra.mxu0 0.0
      %585 = vmatprep.subr.mxu0 0.0
      %586 = vmatpush1.msra.mxu0 0.0
      %587 = vmatprep.subr.mxu0 0.0
      %588 = vmatpush1.msra.mxu0 0.0
      %589 = vmatprep.subr.mxu0 0.0
      %590 = vmatpush1.msra.mxu0 0.0
      %591 = vmatprep.subr.mxu0 0.0
      %592 = vmatpush1.msra.mxu0 0.0
      %593 = vmatprep.subr.mxu0 0.0
      %594 = vmatpush1.msra.mxu0 0.0
      %595 = vmatprep.subr.mxu0 0.0
      %596 = vmatpush1.msra.mxu0 0.0
      %597 = vmatprep.subr.mxu0 0.0
      %598 = vmatpush1.msra.mxu0 0.0
      %599 = vmatprep.subr.mxu0 0.0
      %600 = vmatpush1.msra.mxu0 0.0
      %601 = vmatprep.subr.mxu0 0.0
      %602 = vmatpush1.msra.mxu0 0.0
      %603 = vmatprep.subr.mxu0 0.0
      %604 = vmatpush1.msra.mxu0 0.0
      %605 = vmatprep.subr.mxu0 0.0
      %606 = vmatpush1.msra.mxu0 0.0
      %607 = vmatprep.subr.mxu0 0.0
      %608 = vmatpush1.msra.mxu0 0.0
      %609 = vmatprep.subr.mxu0 0.0
      %610 = vmatpush1.msra.mxu0 0.0
      %611 = vmatprep.subr.mxu0 0.0
      %612 = vmatpush1.msra.mxu0 0.0
      %613 = vmatprep.subr.mxu0 0.0
      %614 = vmatpush1.msra.mxu0 0.0
      %615 = vmatprep.subr.mxu0 0.0
      %616 = vmatpush1.msra.mxu0 0.0
      %617 = vmatprep.subr.mxu0 0.0
      %618 = vmatpush1.msra.mxu0 0.0
      %619 = vmatprep.subr.mxu0 0.0
      %620 = vmatpush1.msra.mxu0 0.0
      %621 = vmatprep.subr.mxu0 0.0
      %622 = vmatpush1.msra.mxu0 0.0
      %623 = vmatprep.mubr.f32.mxu0 0.0
      %624 = vmatmul.mubr.f32.gmra.mrb[0].mxu0 %v557
      %v625 = vpop.f32.mrb[0].mxu0
      %v626 = vadd.f32 %v554, %v625
      %v627 = vpop.f32.mrb[0].mxu0
      %628 = vdwg.mxu0
      %629 = vst [vmem:[#allocation12] sm:$0xff] %v626
    $region49: #{tpu_custom_call.1} parent=1 // pred_fallthru
      _
    // Predicated region
    $region50: #{tpu_custom_call.1} parent=1 // pred_check
      _
    $region51: #{tpu_custom_call.1} parent=1 // pred_check_branch
      %631 = sbr.rel (0) target = $region53
    $region52: #{tpu_custom_call.1} parent=1 // pred_region
      %s633 = ssub.s32 128, 128
      %634 = vsyncadd [#allocation8], %s633
      %s636 = sshll.u32 [#allocation12], 4
      %s637 = int_to_ptr.vmem [resolvable:$true] %s636
      %639 = dma.vmem_to_hbm [thread:$0]  %s637, 128, %s7, [#allocation8]
    $region53: #{tpu_custom_call.1} parent=1 // pred_fallthru
      _
    // Predicated region
    $region54: #{tpu_custom_call.1} parent=1 // pred_check
      _
    $region55: #{tpu_custom_call.1} parent=1 // pred_check_branch
      %641 = sbr.rel (0) target = $region57
    $region56: #{tpu_custom_call.1} parent=1 // pred_region
      %642 = dma.done [#allocation8], 128
    $region57: #{tpu_custom_call.1} parent=1 // pred_fallthru
      _
    %643 = vsyncpa [#allocation7], 1
    %644 = vsyncpa [#allocation10], 1
    %645 = vsyncpa [#allocation8], 1

</llo_original>
